<compile_context>
chip_gen: v6e
topology: v6e:2x2x1
jax: 0.10.0
libtpu: 0.0.40
codegen_flags: <defaults>
</compile_context>

<pallas_src>
import math
import numpy as np

import jax
import jax.numpy as jnp
from jax import lax
from jax.experimental import pallas as pl
from jax.experimental.pallas import tpu as pltpu

# ---------------- deterministic "parameters" from the module __init__ ----------------
_RGB_FROM_HED = np.array([[0.65, 0.70, 0.29],
                          [0.07, 0.99, 0.11],
                          [0.27, 0.57, 0.78]], dtype=np.float32)
_HED_FROM_RGB = np.linalg.inv(_RGB_FROM_HED).astype(np.float32)
_COEFFS = np.array([0.2125, 0.7154, 0.0721], dtype=np.float32)   # rgb2gray weights
_ALPHA = 1.8
_ADJ_CAL = float(10.0 ** (-(math.e ** (1.0 / _ALPHA))))          # adjust_Calibration
_THRESH_FOD = 0.15
_THRESH_MASK = 0.68
_LOG_ADJUST = float(math.log(1e-6))
_INV_LOG_ADJUST = float(1.0 / _LOG_ADJUST)                       # mult instead of div
_NEG_INV_LN10 = float(-1.0 / math.log(10.0))                     # log10(1/x) = -ln(x)/ln10
_NUM_BINS = 20
_HIST_MAX = math.e
_BIN_W = float(_HIST_MAX / _NUM_BINS)

_STATS_LANES = 128   # lane 0 = sum(FOD_relu), lanes 1..20 = histogram, 32..47 = 4x4 blocks
_BLK_LANE0 = 32


def _default_tail_dtype():
    """bf16 elementwise tail only on chips with a bf16-native VPU/EUP (v6e / v7x)."""
    try:
        kind = jax.devices()[0].device_kind.lower()
    except Exception:
        return jnp.float32
    return jnp.bfloat16 if ("v6" in kind or "v7" in kind) else jnp.float32


def _choose_tile_h(H, W, row_multiple=8, budget_bytes=12 * 1024 * 1024):
    """Pick a row-tile height TH dividing H, multiple of `row_multiple` (or TH == H),
    keeping the estimated VMEM footprint under `budget_bytes` (fits v7x's 64 MiB)."""
    # rough per-row f32 VMEM: 2 inputs x 2 bufs x 3 channels, mask block (2 bufs),
    # ~14 live full-tile temporaries.
    per_row = W * 4 * (2 * 2 * 3 + 2 + 14)
    max_th = max(row_multiple, budget_bytes // per_row)
    if H <= max_th:
        return H
    best = None
    th = row_multiple
    while th <= max_th:
        if H % th == 0:
            best = th
        th += row_multiple
    return best if best is not None else H   # fallback: whole image (odd H)


def _make_constants(H, W, tail_dtype):
    """Host-built constants replacing all per-step iota/div/compare work.

    mat    (W, 128): lane 0 = 1 for every column (avg);
                     lane 32+4*rb+cb = 1 if the column lies in column band cb.
    rowsel (H, 128): lane 0 = 1 for every row (avg);
                     lane 32+4*rb+cb = 1 if the row lies in row band rb.
    Remainder rows/cols (H or W not divisible by 4) drop out of the block lanes,
    exactly like torch.unfold in the reference.
    """
    h4, w4 = H // 4, W // 4
    cols = np.arange(W)
    rows = np.arange(H)
    mat = np.zeros((W, _STATS_LANES), np.float32)
    rowsel = np.zeros((H, _STATS_LANES), np.float32)
    mat[:, 0] = 1.0
    rowsel[:, 0] = 1.0
    for l in range(_BLK_LANE0, _BLK_LANE0 + 16):
        rb, cb = divmod(l - _BLK_LANE0, 4)
        mat[(cols // w4) == cb, l] = 1.0
        rowsel[(rows // h4) == rb, l] = 1.0
    return (jnp.asarray(mat, dtype=tail_dtype),
            jnp.asarray(rowsel, dtype=jnp.float32))


def _make_kernel(mask_dtype, tail_dtype):
    m02 = float(_HED_FROM_RGB[0, 2])
    m12 = float(_HED_FROM_RGB[1, 2])
    m22 = float(_HED_FROM_RGB[2, 2])
    c0, c1, c2 = (float(_COEFFS[0]), float(_COEFFS[1]), float(_COEFFS[2]))
    e0 = _LOG_ADJUST * float(_RGB_FROM_HED[2, 0])
    e1 = _LOG_ADJUST * float(_RGB_FROM_HED[2, 1])
    e2 = _LOG_ADJUST * float(_RGB_FROM_HED[2, 2])

    def kernel(in_ref, tg_ref, mat_ref, row_ref, stats_ref, mask_ref):
        t = pl.program_id(1)       # row-tile index (reduction axis, "arbitrary")

        # ---- init the revisited accumulator output at the first row tile ----
        @pl.when(t == 0)
        def _init():
            stats_ref[...] = jnp.zeros_like(stats_ref)

        mat = mat_ref[...]          # (W, 128)  constant: avg + column-band one-hot
        rowsel = row_ref[...]       # (TH, 128) constant: avg + row-band select
        lane = lax.broadcasted_iota(jnp.int32, (1, _STATS_LANES), 1)

        def process(src_ref, idx):
            x = src_ref[...]                          # (1, 3, TH, W)
            r, g, b = x[0, 0], x[0, 1], x[0, 2]

            # ---- separate_stains: only the DAB channel (col 2 of hed_from_rgb) ----
            lr = jnp.log(jnp.maximum(r, 1e-6)) * _INV_LOG_ADJUST
            lg = jnp.log(jnp.maximum(g, 1e-6)) * _INV_LOG_ADJUST
            lb = jnp.log(jnp.maximum(b, 1e-6)) * _INV_LOG_ADJUST
            s2 = jnp.maximum(lr * m02 + lg * m12 + lb * m22, 0.0)

            # ---- combine_stains((0,0,s2)) -> rgb -> grayscale. exp(<=0) in (0,1]
            # and the gray coeffs sum to 1.0, so grey is in (0,1]: no clip needed.
            grey = (jnp.exp(e0 * s2) * c0 + jnp.exp(e1 * s2) * c1
                    + jnp.exp(e2 * s2) * c2)

            # ---- FOD = relu(log10(1/(grey+adj))) ** alpha ----
            fod = jnp.maximum(jnp.log(grey + _ADJ_CAL) * _NEG_INV_LN10, 0.0)
            fod = jnp.where(fod > 0.0,
                            jnp.exp(_ALPHA * jnp.log(jnp.maximum(fod, 1e-30))),
                            0.0)

            # elementwise tail (bf16 on v6e/v7x, f32 otherwise)
            fod_t = fod.astype(tail_dtype)
            fod_relu = jnp.where(fod_t < _THRESH_FOD,
                                 jnp.zeros((), tail_dtype), fod_t)

            # ---- binary mask (FOD >= thresh_mask), streamed out per row tile ----
            mask_ref[idx] = (fod_t >= _THRESH_MASK).astype(mask_dtype)[None]

            # ---- avg (lane 0) + 4x4 block sums (lanes 32..47) via one MXU matmul
            # against the host-built constants; f32 accumulation.
            p = jnp.dot(fod_relu, mat, preferred_element_type=jnp.float32)  # (TH,128)
            vec = jnp.sum(p * rowsel, axis=0, keepdims=True)                # (1,128)

            # ---- 20-bin histogram of FOD via cumulative thresholds (lanes 1..20):
            # S_n = sum(FOD * (FOD >= n*e/20)); hist[n] = S_n - S_{n+1}; top bin = S_19.
            # (Matches torch's floor/clamp bin indices and its per-bin VALUE sums.)
            cum = [jnp.sum(fod_t.astype(jnp.float32))]
            for n in range(1, _NUM_BINS):
                thr = float(n) * _BIN_W
                masked = jnp.where(fod_t >= thr, fod_t, jnp.zeros((), tail_dtype))
                cum.append(jnp.sum(masked.astype(jnp.float32)))
            for n in range(_NUM_BINS):
                h = cum[n] - cum[n + 1] if n + 1 < _NUM_BINS else cum[n]
                vec = jnp.where(lane == (1 + n), h, vec)

            stats_ref[idx] += vec[None]     # (1,1,128), accumulated over row tiles

        process(in_ref, 0)    # inputs  -> stats[0], mask[0]
        process(tg_ref, 1)    # targets -> stats[1], mask[1]

    return kernel


def compute_od_pair(inputs, targets, *, mask_dtype=jnp.bfloat16, tail_dtype=None,
                    tile_h=None, interpret=False):
    """Fused compute_OD for (inputs, targets); both NCHW float32 with C == 3.

    Returns:
      stats: (2, B, 1, 128) f32 -- lane 0 = sum(FOD_relu), lanes 1..20 = histogram
             value-sums of FOD, lanes 32..47 = 4x4 block sums of FOD_relu
             (row-major flat).  index 0 = inputs, index 1 = targets.
      mask:  (2, B, H, W) mask_dtype -- binary mask (FOD >= 0.68).
    """
    B, C, H, W = inputs.shape
    assert C == 3 and targets.shape == inputs.shape
    assert H >= 4 and W >= 4, "4x4 block partition needs H, W >= 4"

    if tail_dtype is None:
        tail_dtype = _default_tail_dtype()
    mask_itemsize = np.dtype(mask_dtype).itemsize
    row_multiple = {4: 8, 2: 16, 1: 32}.get(mask_itemsize, 8)

    TH = tile_h if tile_h is not None else _choose_tile_h(H, W, row_multiple)
    assert H % TH == 0 and (TH % row_multiple == 0 or TH == H), "bad row-tile height"
    RT = H // TH

    mat, rowsel = _make_constants(H, W, tail_dtype)
    kernel = _make_kernel(mask_dtype, tail_dtype)

    cost = pl.CostEstimate(
        flops=int(2 * B * H * W * (90 + 2 * _STATS_LANES)),
        transcendentals=int(2 * B * H * W * 9),
        bytes_accessed=int(2 * B * 3 * H * W * 4                    # rgb reads
                           + 2 * B * H * W * mask_itemsize          # mask writes
                           + B * H * _STATS_LANES * 4               # row selector
                           + W * _STATS_LANES * np.dtype(tail_dtype).itemsize
                           + 2 * 2 * B * _STATS_LANES * 4),
    )

    stats, mask = pl.pallas_call(
        kernel,
        out_shape=(
            jax.ShapeDtypeStruct((2, B, 1, _STATS_LANES), jnp.float32),
            jax.ShapeDtypeStruct((2, B, H, W), mask_dtype),
        ),
        grid_spec=pltpu.PrefetchScalarGridSpec(
            num_scalar_prefetch=0,
            grid=(B, RT),
            in_specs=[
                pl.BlockSpec((1, 3, TH, W), lambda b, t: (b, 0, t, 0)),     # inputs
                pl.BlockSpec((1, 3, TH, W), lambda b, t: (b, 0, t, 0)),     # targets
                pl.BlockSpec((W, _STATS_LANES), lambda b, t: (0, 0)),       # col matrix
                pl.BlockSpec((TH, _STATS_LANES), lambda b, t: (t, 0)),      # row select
            ],
            out_specs=[
                pl.BlockSpec((2, 1, 1, _STATS_LANES), lambda b, t: (0, b, 0, 0)),
                pl.BlockSpec((2, 1, TH, W), lambda b, t: (0, b, t, 0)),
            ],
        ),
        compiler_params=pltpu.CompilerParams(
            dimension_semantics=("parallel", "arbitrary"),
            vmem_limit_bytes=32 * 1024 * 1024,
        ),
        cost_estimate=cost,
        interpret=interpret,
    )(inputs, targets, mat, rowsel)
    return stats, mask


def _mlpa_loss(inputs, targets, *, mask_dtype=jnp.bfloat16, tail_dtype=None):
    """Equivalent of MLPA_LOSS.forward; inputs/targets are NCHW RGB images."""
    B, C, H, W = inputs.shape
    hw = float(H * W)

    stats, mask = compute_od_pair(inputs, targets, mask_dtype=mask_dtype,
                                  tail_dtype=tail_dtype)

    in_avg, tg_avg = stats[0, :, 0, 0], stats[1, :, 0, 0]
    in_hist = stats[0, :, 0, 1:1 + _NUM_BINS]
    tg_hist = stats[1, :, 0, 1:1 + _NUM_BINS]
    in_blk = stats[0, :, 0, _BLK_LANE0:_BLK_LANE0 + 16]
    tg_blk = stats[1, :, 0, _BLK_LANE0:_BLK_LANE0 + 16]

    mlpa_avg = (in_avg - tg_avg) ** 2 / (hw ** 2)                              # (B,)
    mlpa_histo = jnp.sum((in_hist / hw - tg_hist / hw) ** 2, axis=1) / B       # (B,)
    mlpa_block = jnp.mean((in_blk / (hw / 16.0) - tg_blk / (hw / 16.0)) ** 2)  # scalar

    diff = in_avg - tg_avg
    cond = (diff >= tg_avg * -0.4) & (diff <= tg_avg * 0.4)
    loss = jnp.sum(jnp.where(cond, mlpa_histo, mlpa_avg + mlpa_histo)) + mlpa_block
    # Masks are binary (0/1), returned in mask_dtype (bf16 by default) to keep the
    # HBM-write savings; they are exactly representable.
    return loss, mask[0], mask[1]


mlpa_loss = jax.jit(_mlpa_loss, static_argnames=("mask_dtype", "tail_dtype"))


if __name__ == "__main__":
    key = jax.random.PRNGKey(0)
    k1, k2 = jax.random.split(key)
    B, C, H, W = 2, 3, 16, 16
    inputs = jax.random.uniform(k1, (B, C, H, W), dtype=jnp.float32)
    targets = jax.random.uniform(k2, (B, C, H, W), dtype=jnp.float32)

    loss, in_mask, tg_mask = mlpa_loss(inputs, targets)
    jax.block_until_ready((loss, in_mask, tg_mask))
    print("KERNEL_OK")
</pallas_src>

<mosaic_0001>
module attributes {stable_mosaic.version = 11 : i64} {
  func.func @kernel(%arg0: i32, %arg1: i32, %arg2: memref<1x3x16x16xf32, #tpu.memory_space<vmem>>, %arg3: memref<1x3x16x16xf32, #tpu.memory_space<vmem>>, %arg4: memref<16x128xf32, #tpu.memory_space<vmem>>, %arg5: memref<16x128xf32, #tpu.memory_space<vmem>>, %arg6: memref<2x1x1x128xf32, #tpu.memory_space<vmem>>, %arg7: memref<2x1x16x16xbf16, #tpu.memory_space<vmem>>) attributes {dimension_semantics = [#tpu.dimension_semantics<parallel>, #tpu.dimension_semantics<arbitrary>], iteration_bounds = array<i64: 2, 1>, scalar_prefetch = 0 : i64, scratch_operands = 0 : i64, tpu.core_type = #tpu.core_type<tc>, window_params = [{transform_indices = @transform_0, window_bounds = array<i64: 1, 3, 16, 16>}, {transform_indices = @transform_1, window_bounds = array<i64: 1, 3, 16, 16>}, {pipeline_mode = #tpu.pipeline_mode<synchronous>, transform_indices = @transform_2, window_bounds = array<i64: 16, 128>}, {transform_indices = @transform_3, window_bounds = array<i64: 16, 128>}, {transform_indices = @transform_4, window_bounds = array<i64: 2, 1, 1, 128>}, {transform_indices = @transform_5, window_bounds = array<i64: 2, 1, 16, 16>}]} {
    %c0_i32 = arith.constant 0 : i32
    %0 = arith.cmpi eq, %arg1, %c0_i32 : i32
    %1 = arith.extui %0 : i1 to i32
    %c0_i32_0 = arith.constant 0 : i32
    %2 = arith.cmpi ne, %1, %c0_i32_0 : i32
    scf.if %2 {
      %cst_226 = arith.constant 0.000000e+00 : f32
      %696 = vector.broadcast %cst_226 : f32 to vector<2x1x1x128xf32>
      %c0_227 = arith.constant 0 : index
      %c0_228 = arith.constant 0 : index
      %c0_229 = arith.constant 0 : index
      %c0_230 = arith.constant 0 : index
      %697 = vector.load %arg6[%c0_227, %c0_228, %c0_229, %c0_230] : memref<2x1x1x128xf32, #tpu.memory_space<vmem>>, vector<2x1x1x128xf32>
      tpu.vector_store %arg6[%c0_227, %c0_228, %c0_229, %c0_230], %696 {strides = array<i32>} : memref<2x1x1x128xf32, #tpu.memory_space<vmem>>, vector<2x1x1x128xf32>,
    } else {
    }
    %c0 = arith.constant 0 : index
    %c0_1 = arith.constant 0 : index
    %3 = vector.load %arg4[%c0, %c0_1] : memref<16x128xf32, #tpu.memory_space<vmem>>, vector<16x128xf32>
    %c0_2 = arith.constant 0 : index
    %c0_3 = arith.constant 0 : index
    %4 = vector.load %arg5[%c0_2, %c0_3] : memref<16x128xf32, #tpu.memory_space<vmem>>, vector<16x128xf32>
    %5 = tpu.iota {dimensions = array<i32: 1>} : vector<1x128xi32>
    %c0_4 = arith.constant 0 : index
    %c0_5 = arith.constant 0 : index
    %c0_6 = arith.constant 0 : index
    %c0_7 = arith.constant 0 : index
    %6 = vector.load %arg2[%c0_4, %c0_5, %c0_6, %c0_7] : memref<1x3x16x16xf32, #tpu.memory_space<vmem>>, vector<1x3x16x16xf32>
    %7 = vector.extract_strided_slice %6 {offsets = [0, 0, 0, 0], sizes = [1, 1, 16, 16], strides = [1, 1, 1, 1]} : vector<1x3x16x16xf32> to vector<1x1x16x16xf32>
    %8 = vector.shape_cast %7 : vector<1x1x16x16xf32> to vector<16x16xf32>
    %9 = vector.extract_strided_slice %6 {offsets = [0, 1, 0, 0], sizes = [1, 1, 16, 16], strides = [1, 1, 1, 1]} : vector<1x3x16x16xf32> to vector<1x1x16x16xf32>
    %10 = vector.shape_cast %9 : vector<1x1x16x16xf32> to vector<16x16xf32>
    %11 = vector.extract_strided_slice %6 {offsets = [0, 2, 0, 0], sizes = [1, 1, 16, 16], strides = [1, 1, 1, 1]} : vector<1x3x16x16xf32> to vector<1x1x16x16xf32>
    %12 = vector.shape_cast %11 : vector<1x1x16x16xf32> to vector<16x16xf32>
    %cst = arith.constant 9.99999997E-7 : f32
    %13 = vector.broadcast %cst : f32 to vector<16x16xf32>
    %14 = arith.maximumf %8, %13 : vector<16x16xf32>
    %15 = math.log %14 : vector<16x16xf32>
    %cst_8 = arith.constant -0.0723824129 : f32
    %16 = vector.broadcast %cst_8 : f32 to vector<16x16xf32>
    %17 = arith.mulf %15, %16 : vector<16x16xf32>
    %cst_9 = arith.constant 9.99999997E-7 : f32
    %18 = vector.broadcast %cst_9 : f32 to vector<16x16xf32>
    %19 = arith.maximumf %10, %18 : vector<16x16xf32>
    %20 = math.log %19 : vector<16x16xf32>
    %cst_10 = arith.constant -0.0723824129 : f32
    %21 = vector.broadcast %cst_10 : f32 to vector<16x16xf32>
    %22 = arith.mulf %20, %21 : vector<16x16xf32>
    %cst_11 = arith.constant 9.99999997E-7 : f32
    %23 = vector.broadcast %cst_11 : f32 to vector<16x16xf32>
    %24 = arith.maximumf %12, %23 : vector<16x16xf32>
    %25 = math.log %24 : vector<16x16xf32>
    %cst_12 = arith.constant -0.0723824129 : f32
    %26 = vector.broadcast %cst_12 : f32 to vector<16x16xf32>
    %27 = arith.mulf %25, %26 : vector<16x16xf32>
    %cst_13 = arith.constant -0.556115866 : f32
    %28 = vector.broadcast %cst_13 : f32 to vector<16x16xf32>
    %29 = arith.mulf %17, %28 : vector<16x16xf32>
    %cst_14 = arith.constant -0.135521799 : f32
    %30 = vector.broadcast %cst_14 : f32 to vector<16x16xf32>
    %31 = arith.mulf %22, %30 : vector<16x16xf32>
    %32 = arith.addf %29, %31 : vector<16x16xf32>
    %cst_15 = arith.constant 1.57358813 : f32
    %33 = vector.broadcast %cst_15 : f32 to vector<16x16xf32>
    %34 = arith.mulf %27, %33 : vector<16x16xf32>
    %35 = arith.addf %32, %34 : vector<16x16xf32>
    %cst_16 = arith.constant 0.000000e+00 : f32
    %36 = vector.broadcast %cst_16 : f32 to vector<16x16xf32>
    %37 = arith.maximumf %35, %36 : vector<16x16xf32>
    %cst_17 = arith.constant -3.73018789 : f32
    %38 = vector.broadcast %cst_17 : f32 to vector<16x16xf32>
    %39 = arith.mulf %38, %37 : vector<16x16xf32>
    %40 = math.exp %39 : vector<16x16xf32>
    %cst_18 = arith.constant 2.125000e-01 : f32
    %41 = vector.broadcast %cst_18 : f32 to vector<16x16xf32>
    %42 = arith.mulf %40, %41 : vector<16x16xf32>
    %cst_19 = arith.constant -7.87484073 : f32
    %43 = vector.broadcast %cst_19 : f32 to vector<16x16xf32>
    %44 = arith.mulf %43, %37 : vector<16x16xf32>
    %45 = math.exp %44 : vector<16x16xf32>
    %cst_20 = arith.constant 7.154000e-01 : f32
    %46 = vector.broadcast %cst_20 : f32 to vector<16x16xf32>
    %47 = arith.mulf %45, %46 : vector<16x16xf32>
    %48 = arith.addf %42, %47 : vector<16x16xf32>
    %cst_21 = arith.constant -10.7760983 : f32
    %49 = vector.broadcast %cst_21 : f32 to vector<16x16xf32>
    %50 = arith.mulf %49, %37 : vector<16x16xf32>
    %51 = math.exp %50 : vector<16x16xf32>
    %cst_22 = arith.constant 7.210000e-02 : f32
    %52 = vector.broadcast %cst_22 : f32 to vector<16x16xf32>
    %53 = arith.mulf %51, %52 : vector<16x16xf32>
    %54 = arith.addf %48, %53 : vector<16x16xf32>
    %cst_23 = arith.constant 0.0180755276 : f32
    %55 = vector.broadcast %cst_23 : f32 to vector<16x16xf32>
    %56 = arith.addf %54, %55 : vector<16x16xf32>
    %57 = math.log %56 : vector<16x16xf32>
    %cst_24 = arith.constant -0.434294492 : f32
    %58 = vector.broadcast %cst_24 : f32 to vector<16x16xf32>
    %59 = arith.mulf %57, %58 : vector<16x16xf32>
    %cst_25 = arith.constant 0.000000e+00 : f32
    %60 = vector.broadcast %cst_25 : f32 to vector<16x16xf32>
    %61 = arith.maximumf %59, %60 : vector<16x16xf32>
    %cst_26 = arith.constant 0.000000e+00 : f32
    %62 = vector.broadcast %cst_26 : f32 to vector<16x16xf32>
    %63 = arith.cmpf ogt, %61, %62 : vector<16x16xf32>
    %cst_27 = arith.constant 1.000000e-30 : f32
    %64 = vector.broadcast %cst_27 : f32 to vector<16x16xf32>
    %65 = arith.maximumf %61, %64 : vector<16x16xf32>
    %66 = math.log %65 : vector<16x16xf32>
    %cst_28 = arith.constant 1.800000e+00 : f32
    %67 = vector.broadcast %cst_28 : f32 to vector<16x16xf32>
    %68 = arith.mulf %67, %66 : vector<16x16xf32>
    %69 = math.exp %68 : vector<16x16xf32>
    %cst_29 = arith.constant 0.000000e+00 : f32
    %70 = vector.broadcast %cst_29 : f32 to vector<16x16xf32>
    %71 = arith.select %63, %69, %70 : vector<16x16xi1>, vector<16x16xf32>
    %cst_30 = arith.constant 1.500000e-01 : f32
    %72 = vector.broadcast %cst_30 : f32 to vector<16x16xf32>
    %73 = arith.cmpf olt, %71, %72 : vector<16x16xf32>
    %cst_31 = arith.constant 0.000000e+00 : f32
    %74 = vector.broadcast %cst_31 : f32 to vector<16x16xf32>
    %75 = arith.select %73, %74, %71 : vector<16x16xi1>, vector<16x16xf32>
    %cst_32 = arith.constant 6.800000e-01 : f32
    %76 = vector.broadcast %cst_32 : f32 to vector<16x16xf32>
    %77 = arith.cmpf oge, %71, %76 : vector<16x16xf32>
    %78 = arith.extui %77 : vector<16x16xi1> to vector<16x16xi32>
    %79 = arith.sitofp %78 : vector<16x16xi32> to vector<16x16xf32>
    %80 = arith.truncf %79 : vector<16x16xf32> to vector<16x16xbf16>
    %81 = vector.shape_cast %80 : vector<16x16xbf16> to vector<1x16x16xbf16>
    %c0_33 = arith.constant 0 : index
    %c0_34 = arith.constant 0 : index
    %c0_35 = arith.constant 0 : index
    %c0_36 = arith.constant 0 : index
    %82 = vector.load %arg7[%c0_33, %c0_34, %c0_35, %c0_36] : memref<2x1x16x16xbf16, #tpu.memory_space<vmem>>, vector<1x1x16x16xbf16>
    %83 = vector.shape_cast %82 : vector<1x1x16x16xbf16> to vector<1x16x16xbf16>
    %84 = vector.shape_cast %81 : vector<1x16x16xbf16> to vector<1x1x16x16xbf16>
    tpu.vector_store %arg7[%c0_33, %c0_34, %c0_35, %c0_36], %84 {strides = array<i32>} : memref<2x1x16x16xbf16, #tpu.memory_space<vmem>>, vector<1x1x16x16xbf16>,
    %cst_37 = arith.constant dense<0.000000e+00> : vector<16x128xf32>
    %85 = tpu.matmul %75, %3, %cst_37 {dimension_numbers = #tpu.dot_dimension_numbers<[1], [0], [0], [1], [0, 0, 1, 1], [], []>} : vector<16x16xf32>, vector<16x128xf32>, vector<16x128xf32> -> vector<16x128xf32>
    %86 = arith.mulf %85, %4 : vector<16x128xf32>
    %cst_38 = arith.constant dense<0.000000e+00> : vector<128xf32>
    %87 = vector.multi_reduction <add>, %86, %cst_38 [0] : vector<16x128xf32> to vector<128xf32>
    %88 = vector.shape_cast %87 : vector<128xf32> to vector<1x128xf32>
    %89 = vector.shape_cast %71 : vector<16x16xf32> to vector<1x16x16xf32>
    %cst_39 = arith.constant dense<0.000000e+00> : vector<1xf32>
    %90 = vector.multi_reduction <add>, %89, %cst_39 [1, 2] : vector<1x16x16xf32> to vector<1xf32>
    %91 = vector.shape_cast %90 : vector<1xf32> to vector<1x1x1xf32>
    %92 = vector.extract %91[0, 0, 0] : f32 from vector<1x1x1xf32>
    %cst_40 = arith.constant 0.135914087 : f32
    %93 = vector.broadcast %cst_40 : f32 to vector<16x16xf32>
    %94 = arith.cmpf oge, %71, %93 : vector<16x16xf32>
    %cst_41 = arith.constant 0.000000e+00 : f32
    %95 = vector.broadcast %cst_41 : f32 to vector<16x16xf32>
    %96 = arith.select %94, %71, %95 : vector<16x16xi1>, vector<16x16xf32>
    %97 = vector.shape_cast %96 : vector<16x16xf32> to vector<1x16x16xf32>
    %cst_42 = arith.constant dense<0.000000e+00> : vector<1xf32>
    %98 = vector.multi_reduction <add>, %97, %cst_42 [1, 2] : vector<1x16x16xf32> to vector<1xf32>
    %99 = vector.shape_cast %98 : vector<1xf32> to vector<1x1x1xf32>
    %100 = vector.extract %99[0, 0, 0] : f32 from vector<1x1x1xf32>
    %cst_43 = arith.constant 0.271828175 : f32
    %101 = vector.broadcast %cst_43 : f32 to vector<16x16xf32>
    %102 = arith.cmpf oge, %71, %101 : vector<16x16xf32>
    %cst_44 = arith.constant 0.000000e+00 : f32
    %103 = vector.broadcast %cst_44 : f32 to vector<16x16xf32>
    %104 = arith.select %102, %71, %103 : vector<16x16xi1>, vector<16x16xf32>
    %105 = vector.shape_cast %104 : vector<16x16xf32> to vector<1x16x16xf32>
    %cst_45 = arith.constant dense<0.000000e+00> : vector<1xf32>
    %106 = vector.multi_reduction <add>, %105, %cst_45 [1, 2] : vector<1x16x16xf32> to vector<1xf32>
    %107 = vector.shape_cast %106 : vector<1xf32> to vector<1x1x1xf32>
    %108 = vector.extract %107[0, 0, 0] : f32 from vector<1x1x1xf32>
    %cst_46 = arith.constant 0.407742262 : f32
    %109 = vector.broadcast %cst_46 : f32 to vector<16x16xf32>
    %110 = arith.cmpf oge, %71, %109 : vector<16x16xf32>
    %cst_47 = arith.constant 0.000000e+00 : f32
    %111 = vector.broadcast %cst_47 : f32 to vector<16x16xf32>
    %112 = arith.select %110, %71, %111 : vector<16x16xi1>, vector<16x16xf32>
    %113 = vector.shape_cast %112 : vector<16x16xf32> to vector<1x16x16xf32>
    %cst_48 = arith.constant dense<0.000000e+00> : vector<1xf32>
    %114 = vector.multi_reduction <add>, %113, %cst_48 [1, 2] : vector<1x16x16xf32> to vector<1xf32>
    %115 = vector.shape_cast %114 : vector<1xf32> to vector<1x1x1xf32>
    %116 = vector.extract %115[0, 0, 0] : f32 from vector<1x1x1xf32>
    %cst_49 = arith.constant 0.543656349 : f32
    %117 = vector.broadcast %cst_49 : f32 to vector<16x16xf32>
    %118 = arith.cmpf oge, %71, %117 : vector<16x16xf32>
    %cst_50 = arith.constant 0.000000e+00 : f32
    %119 = vector.broadcast %cst_50 : f32 to vector<16x16xf32>
    %120 = arith.select %118, %71, %119 : vector<16x16xi1>, vector<16x16xf32>
    %121 = vector.shape_cast %120 : vector<16x16xf32> to vector<1x16x16xf32>
    %cst_51 = arith.constant dense<0.000000e+00> : vector<1xf32>
    %122 = vector.multi_reduction <add>, %121, %cst_51 [1, 2] : vector<1x16x16xf32> to vector<1xf32>
    %123 = vector.shape_cast %122 : vector<1xf32> to vector<1x1x1xf32>
    %124 = vector.extract %123[0, 0, 0] : f32 from vector<1x1x1xf32>
    %cst_52 = arith.constant 0.679570436 : f32
    %125 = vector.broadcast %cst_52 : f32 to vector<16x16xf32>
    %126 = arith.cmpf oge, %71, %125 : vector<16x16xf32>
    %cst_53 = arith.constant 0.000000e+00 : f32
    %127 = vector.broadcast %cst_53 : f32 to vector<16x16xf32>
    %128 = arith.select %126, %71, %127 : vector<16x16xi1>, vector<16x16xf32>
    %129 = vector.shape_cast %128 : vector<16x16xf32> to vector<1x16x16xf32>
    %cst_54 = arith.constant dense<0.000000e+00> : vector<1xf32>
    %130 = vector.multi_reduction <add>, %129, %cst_54 [1, 2] : vector<1x16x16xf32> to vector<1xf32>
    %131 = vector.shape_cast %130 : vector<1xf32> to vector<1x1x1xf32>
    %132 = vector.extract %131[0, 0, 0] : f32 from vector<1x1x1xf32>
    %cst_55 = arith.constant 0.815484523 : f32
    %133 = vector.broadcast %cst_55 : f32 to vector<16x16xf32>
    %134 = arith.cmpf oge, %71, %133 : vector<16x16xf32>
    %cst_56 = arith.constant 0.000000e+00 : f32
    %135 = vector.broadcast %cst_56 : f32 to vector<16x16xf32>
    %136 = arith.select %134, %71, %135 : vector<16x16xi1>, vector<16x16xf32>
    %137 = vector.shape_cast %136 : vector<16x16xf32> to vector<1x16x16xf32>
    %cst_57 = arith.constant dense<0.000000e+00> : vector<1xf32>
    %138 = vector.multi_reduction <add>, %137, %cst_57 [1, 2] : vector<1x16x16xf32> to vector<1xf32>
    %139 = vector.shape_cast %138 : vector<1xf32> to vector<1x1x1xf32>
    %140 = vector.extract %139[0, 0, 0] : f32 from vector<1x1x1xf32>
    %cst_58 = arith.constant 0.951398611 : f32
    %141 = vector.broadcast %cst_58 : f32 to vector<16x16xf32>
    %142 = arith.cmpf oge, %71, %141 : vector<16x16xf32>
    %cst_59 = arith.constant 0.000000e+00 : f32
    %143 = vector.broadcast %cst_59 : f32 to vector<16x16xf32>
    %144 = arith.select %142, %71, %143 : vector<16x16xi1>, vector<16x16xf32>
    %145 = vector.shape_cast %144 : vector<16x16xf32> to vector<1x16x16xf32>
    %cst_60 = arith.constant dense<0.000000e+00> : vector<1xf32>
    %146 = vector.multi_reduction <add>, %145, %cst_60 [1, 2] : vector<1x16x16xf32> to vector<1xf32>
    %147 = vector.shape_cast %146 : vector<1xf32> to vector<1x1x1xf32>
    %148 = vector.extract %147[0, 0, 0] : f32 from vector<1x1x1xf32>
    %cst_61 = arith.constant 1.0873127 : f32
    %149 = vector.broadcast %cst_61 : f32 to vector<16x16xf32>
    %150 = arith.cmpf oge, %71, %149 : vector<16x16xf32>
    %cst_62 = arith.constant 0.000000e+00 : f32
    %151 = vector.broadcast %cst_62 : f32 to vector<16x16xf32>
    %152 = arith.select %150, %71, %151 : vector<16x16xi1>, vector<16x16xf32>
    %153 = vector.shape_cast %152 : vector<16x16xf32> to vector<1x16x16xf32>
    %cst_63 = arith.constant dense<0.000000e+00> : vector<1xf32>
    %154 = vector.multi_reduction <add>, %153, %cst_63 [1, 2] : vector<1x16x16xf32> to vector<1xf32>
    %155 = vector.shape_cast %154 : vector<1xf32> to vector<1x1x1xf32>
    %156 = vector.extract %155[0, 0, 0] : f32 from vector<1x1x1xf32>
    %cst_64 = arith.constant 1.22322679 : f32
    %157 = vector.broadcast %cst_64 : f32 to vector<16x16xf32>
    %158 = arith.cmpf oge, %71, %157 : vector<16x16xf32>
    %cst_65 = arith.constant 0.000000e+00 : f32
    %159 = vector.broadcast %cst_65 : f32 to vector<16x16xf32>
    %160 = arith.select %158, %71, %159 : vector<16x16xi1>, vector<16x16xf32>
    %161 = vector.shape_cast %160 : vector<16x16xf32> to vector<1x16x16xf32>
    %cst_66 = arith.constant dense<0.000000e+00> : vector<1xf32>
    %162 = vector.multi_reduction <add>, %161, %cst_66 [1, 2] : vector<1x16x16xf32> to vector<1xf32>
    %163 = vector.shape_cast %162 : vector<1xf32> to vector<1x1x1xf32>
    %164 = vector.extract %163[0, 0, 0] : f32 from vector<1x1x1xf32>
    %cst_67 = arith.constant 1.35914087 : f32
    %165 = vector.broadcast %cst_67 : f32 to vector<16x16xf32>
    %166 = arith.cmpf oge, %71, %165 : vector<16x16xf32>
    %cst_68 = arith.constant 0.000000e+00 : f32
    %167 = vector.broadcast %cst_68 : f32 to vector<16x16xf32>
    %168 = arith.select %166, %71, %167 : vector<16x16xi1>, vector<16x16xf32>
    %169 = vector.shape_cast %168 : vector<16x16xf32> to vector<1x16x16xf32>
    %cst_69 = arith.constant dense<0.000000e+00> : vector<1xf32>
    %170 = vector.multi_reduction <add>, %169, %cst_69 [1, 2] : vector<1x16x16xf32> to vector<1xf32>
    %171 = vector.shape_cast %170 : vector<1xf32> to vector<1x1x1xf32>
    %172 = vector.extract %171[0, 0, 0] : f32 from vector<1x1x1xf32>
    %cst_70 = arith.constant 1.49505496 : f32
    %173 = vector.broadcast %cst_70 : f32 to vector<16x16xf32>
    %174 = arith.cmpf oge, %71, %173 : vector<16x16xf32>
    %cst_71 = arith.constant 0.000000e+00 : f32
    %175 = vector.broadcast %cst_71 : f32 to vector<16x16xf32>
    %176 = arith.select %174, %71, %175 : vector<16x16xi1>, vector<16x16xf32>
    %177 = vector.shape_cast %176 : vector<16x16xf32> to vector<1x16x16xf32>
    %cst_72 = arith.constant dense<0.000000e+00> : vector<1xf32>
    %178 = vector.multi_reduction <add>, %177, %cst_72 [1, 2] : vector<1x16x16xf32> to vector<1xf32>
    %179 = vector.shape_cast %178 : vector<1xf32> to vector<1x1x1xf32>
    %180 = vector.extract %179[0, 0, 0] : f32 from vector<1x1x1xf32>
    %cst_73 = arith.constant 1.63096905 : f32
    %181 = vector.broadcast %cst_73 : f32 to vector<16x16xf32>
    %182 = arith.cmpf oge, %71, %181 : vector<16x16xf32>
    %cst_74 = arith.constant 0.000000e+00 : f32
    %183 = vector.broadcast %cst_74 : f32 to vector<16x16xf32>
    %184 = arith.select %182, %71, %183 : vector<16x16xi1>, vector<16x16xf32>
    %185 = vector.shape_cast %184 : vector<16x16xf32> to vector<1x16x16xf32>
    %cst_75 = arith.constant dense<0.000000e+00> : vector<1xf32>
    %186 = vector.multi_reduction <add>, %185, %cst_75 [1, 2] : vector<1x16x16xf32> to vector<1xf32>
    %187 = vector.shape_cast %186 : vector<1xf32> to vector<1x1x1xf32>
    %188 = vector.extract %187[0, 0, 0] : f32 from vector<1x1x1xf32>
    %cst_76 = arith.constant 1.76688313 : f32
    %189 = vector.broadcast %cst_76 : f32 to vector<16x16xf32>
    %190 = arith.cmpf oge, %71, %189 : vector<16x16xf32>
    %cst_77 = arith.constant 0.000000e+00 : f32
    %191 = vector.broadcast %cst_77 : f32 to vector<16x16xf32>
    %192 = arith.select %190, %71, %191 : vector<16x16xi1>, vector<16x16xf32>
    %193 = vector.shape_cast %192 : vector<16x16xf32> to vector<1x16x16xf32>
    %cst_78 = arith.constant dense<0.000000e+00> : vector<1xf32>
    %194 = vector.multi_reduction <add>, %193, %cst_78 [1, 2] : vector<1x16x16xf32> to vector<1xf32>
    %195 = vector.shape_cast %194 : vector<1xf32> to vector<1x1x1xf32>
    %196 = vector.extract %195[0, 0, 0] : f32 from vector<1x1x1xf32>
    %cst_79 = arith.constant 1.90279722 : f32
    %197 = vector.broadcast %cst_79 : f32 to vector<16x16xf32>
    %198 = arith.cmpf oge, %71, %197 : vector<16x16xf32>
    %cst_80 = arith.constant 0.000000e+00 : f32
    %199 = vector.broadcast %cst_80 : f32 to vector<16x16xf32>
    %200 = arith.select %198, %71, %199 : vector<16x16xi1>, vector<16x16xf32>
    %201 = vector.shape_cast %200 : vector<16x16xf32> to vector<1x16x16xf32>
    %cst_81 = arith.constant dense<0.000000e+00> : vector<1xf32>
    %202 = vector.multi_reduction <add>, %201, %cst_81 [1, 2] : vector<1x16x16xf32> to vector<1xf32>
    %203 = vector.shape_cast %202 : vector<1xf32> to vector<1x1x1xf32>
    %204 = vector.extract %203[0, 0, 0] : f32 from vector<1x1x1xf32>
    %cst_82 = arith.constant 2.03871131 : f32
    %205 = vector.broadcast %cst_82 : f32 to vector<16x16xf32>
    %206 = arith.cmpf oge, %71, %205 : vector<16x16xf32>
    %cst_83 = arith.constant 0.000000e+00 : f32
    %207 = vector.broadcast %cst_83 : f32 to vector<16x16xf32>
    %208 = arith.select %206, %71, %207 : vector<16x16xi1>, vector<16x16xf32>
    %209 = vector.shape_cast %208 : vector<16x16xf32> to vector<1x16x16xf32>
    %cst_84 = arith.constant dense<0.000000e+00> : vector<1xf32>
    %210 = vector.multi_reduction <add>, %209, %cst_84 [1, 2] : vector<1x16x16xf32> to vector<1xf32>
    %211 = vector.shape_cast %210 : vector<1xf32> to vector<1x1x1xf32>
    %212 = vector.extract %211[0, 0, 0] : f32 from vector<1x1x1xf32>
    %cst_85 = arith.constant 2.1746254 : f32
    %213 = vector.broadcast %cst_85 : f32 to vector<16x16xf32>
    %214 = arith.cmpf oge, %71, %213 : vector<16x16xf32>
    %cst_86 = arith.constant 0.000000e+00 : f32
    %215 = vector.broadcast %cst_86 : f32 to vector<16x16xf32>
    %216 = arith.select %214, %71, %215 : vector<16x16xi1>, vector<16x16xf32>
    %217 = vector.shape_cast %216 : vector<16x16xf32> to vector<1x16x16xf32>
    %cst_87 = arith.constant dense<0.000000e+00> : vector<1xf32>
    %218 = vector.multi_reduction <add>, %217, %cst_87 [1, 2] : vector<1x16x16xf32> to vector<1xf32>
    %219 = vector.shape_cast %218 : vector<1xf32> to vector<1x1x1xf32>
    %220 = vector.extract %219[0, 0, 0] : f32 from vector<1x1x1xf32>
    %cst_88 = arith.constant 2.31053948 : f32
    %221 = vector.broadcast %cst_88 : f32 to vector<16x16xf32>
    %222 = arith.cmpf oge, %71, %221 : vector<16x16xf32>
    %cst_89 = arith.constant 0.000000e+00 : f32
    %223 = vector.broadcast %cst_89 : f32 to vector<16x16xf32>
    %224 = arith.select %222, %71, %223 : vector<16x16xi1>, vector<16x16xf32>
    %225 = vector.shape_cast %224 : vector<16x16xf32> to vector<1x16x16xf32>
    %cst_90 = arith.constant dense<0.000000e+00> : vector<1xf32>
    %226 = vector.multi_reduction <add>, %225, %cst_90 [1, 2] : vector<1x16x16xf32> to vector<1xf32>
    %227 = vector.shape_cast %226 : vector<1xf32> to vector<1x1x1xf32>
    %228 = vector.extract %227[0, 0, 0] : f32 from vector<1x1x1xf32>
    %cst_91 = arith.constant 2.44645357 : f32
    %229 = vector.broadcast %cst_91 : f32 to vector<16x16xf32>
    %230 = arith.cmpf oge, %71, %229 : vector<16x16xf32>
    %cst_92 = arith.constant 0.000000e+00 : f32
    %231 = vector.broadcast %cst_92 : f32 to vector<16x16xf32>
    %232 = arith.select %230, %71, %231 : vector<16x16xi1>, vector<16x16xf32>
    %233 = vector.shape_cast %232 : vector<16x16xf32> to vector<1x16x16xf32>
    %cst_93 = arith.constant dense<0.000000e+00> : vector<1xf32>
    %234 = vector.multi_reduction <add>, %233, %cst_93 [1, 2] : vector<1x16x16xf32> to vector<1xf32>
    %235 = vector.shape_cast %234 : vector<1xf32> to vector<1x1x1xf32>
    %236 = vector.extract %235[0, 0, 0] : f32 from vector<1x1x1xf32>
    %cst_94 = arith.constant 2.58236766 : f32
    %237 = vector.broadcast %cst_94 : f32 to vector<16x16xf32>
    %238 = arith.cmpf oge, %71, %237 : vector<16x16xf32>
    %cst_95 = arith.constant 0.000000e+00 : f32
    %239 = vector.broadcast %cst_95 : f32 to vector<16x16xf32>
    %240 = arith.select %238, %71, %239 : vector<16x16xi1>, vector<16x16xf32>
    %241 = vector.shape_cast %240 : vector<16x16xf32> to vector<1x16x16xf32>
    %cst_96 = arith.constant dense<0.000000e+00> : vector<1xf32>
    %242 = vector.multi_reduction <add>, %241, %cst_96 [1, 2] : vector<1x16x16xf32> to vector<1xf32>
    %243 = vector.shape_cast %242 : vector<1xf32> to vector<1x1x1xf32>
    %244 = vector.extract %243[0, 0, 0] : f32 from vector<1x1x1xf32>
    %245 = arith.subf %92, %100 : f32
    %c1_i32 = arith.constant 1 : i32
    %246 = vector.broadcast %c1_i32 : i32 to vector<1x128xi32>
    %247 = arith.cmpi eq, %5, %246 : vector<1x128xi32>
    %248 = vector.broadcast %245 : f32 to vector<1x128xf32>
    %249 = arith.select %247, %248, %88 : vector<1x128xi1>, vector<1x128xf32>
    %250 = arith.subf %100, %108 : f32
    %c2_i32 = arith.constant 2 : i32
    %251 = vector.broadcast %c2_i32 : i32 to vector<1x128xi32>
    %252 = arith.cmpi eq, %5, %251 : vector<1x128xi32>
    %253 = vector.broadcast %250 : f32 to vector<1x128xf32>
    %254 = arith.select %252, %253, %249 : vector<1x128xi1>, vector<1x128xf32>
    %255 = arith.subf %108, %116 : f32
    %c3_i32 = arith.constant 3 : i32
    %256 = vector.broadcast %c3_i32 : i32 to vector<1x128xi32>
    %257 = arith.cmpi eq, %5, %256 : vector<1x128xi32>
    %258 = vector.broadcast %255 : f32 to vector<1x128xf32>
    %259 = arith.select %257, %258, %254 : vector<1x128xi1>, vector<1x128xf32>
    %260 = arith.subf %116, %124 : f32
    %c4_i32 = arith.constant 4 : i32
    %261 = vector.broadcast %c4_i32 : i32 to vector<1x128xi32>
    %262 = arith.cmpi eq, %5, %261 : vector<1x128xi32>
    %263 = vector.broadcast %260 : f32 to vector<1x128xf32>
    %264 = arith.select %262, %263, %259 : vector<1x128xi1>, vector<1x128xf32>
    %265 = arith.subf %124, %132 : f32
    %c5_i32 = arith.constant 5 : i32
    %266 = vector.broadcast %c5_i32 : i32 to vector<1x128xi32>
    %267 = arith.cmpi eq, %5, %266 : vector<1x128xi32>
    %268 = vector.broadcast %265 : f32 to vector<1x128xf32>
    %269 = arith.select %267, %268, %264 : vector<1x128xi1>, vector<1x128xf32>
    %270 = arith.subf %132, %140 : f32
    %c6_i32 = arith.constant 6 : i32
    %271 = vector.broadcast %c6_i32 : i32 to vector<1x128xi32>
    %272 = arith.cmpi eq, %5, %271 : vector<1x128xi32>
    %273 = vector.broadcast %270 : f32 to vector<1x128xf32>
    %274 = arith.select %272, %273, %269 : vector<1x128xi1>, vector<1x128xf32>
    %275 = arith.subf %140, %148 : f32
    %c7_i32 = arith.constant 7 : i32
    %276 = vector.broadcast %c7_i32 : i32 to vector<1x128xi32>
    %277 = arith.cmpi eq, %5, %276 : vector<1x128xi32>
    %278 = vector.broadcast %275 : f32 to vector<1x128xf32>
    %279 = arith.select %277, %278, %274 : vector<1x128xi1>, vector<1x128xf32>
    %280 = arith.subf %148, %156 : f32
    %c8_i32 = arith.constant 8 : i32
    %281 = vector.broadcast %c8_i32 : i32 to vector<1x128xi32>
    %282 = arith.cmpi eq, %5, %281 : vector<1x128xi32>
    %283 = vector.broadcast %280 : f32 to vector<1x128xf32>
    %284 = arith.select %282, %283, %279 : vector<1x128xi1>, vector<1x128xf32>
    %285 = arith.subf %156, %164 : f32
    %c9_i32 = arith.constant 9 : i32
    %286 = vector.broadcast %c9_i32 : i32 to vector<1x128xi32>
    %287 = arith.cmpi eq, %5, %286 : vector<1x128xi32>
    %288 = vector.broadcast %285 : f32 to vector<1x128xf32>
    %289 = arith.select %287, %288, %284 : vector<1x128xi1>, vector<1x128xf32>
    %290 = arith.subf %164, %172 : f32
    %c10_i32 = arith.constant 10 : i32
    %291 = vector.broadcast %c10_i32 : i32 to vector<1x128xi32>
    %292 = arith.cmpi eq, %5, %291 : vector<1x128xi32>
    %293 = vector.broadcast %290 : f32 to vector<1x128xf32>
    %294 = arith.select %292, %293, %289 : vector<1x128xi1>, vector<1x128xf32>
    %295 = arith.subf %172, %180 : f32
    %c11_i32 = arith.constant 11 : i32
    %296 = vector.broadcast %c11_i32 : i32 to vector<1x128xi32>
    %297 = arith.cmpi eq, %5, %296 : vector<1x128xi32>
    %298 = vector.broadcast %295 : f32 to vector<1x128xf32>
    %299 = arith.select %297, %298, %294 : vector<1x128xi1>, vector<1x128xf32>
    %300 = arith.subf %180, %188 : f32
    %c12_i32 = arith.constant 12 : i32
    %301 = vector.broadcast %c12_i32 : i32 to vector<1x128xi32>
    %302 = arith.cmpi eq, %5, %301 : vector<1x128xi32>
    %303 = vector.broadcast %300 : f32 to vector<1x128xf32>
    %304 = arith.select %302, %303, %299 : vector<1x128xi1>, vector<1x128xf32>
    %305 = arith.subf %188, %196 : f32
    %c13_i32 = arith.constant 13 : i32
    %306 = vector.broadcast %c13_i32 : i32 to vector<1x128xi32>
    %307 = arith.cmpi eq, %5, %306 : vector<1x128xi32>
    %308 = vector.broadcast %305 : f32 to vector<1x128xf32>
    %309 = arith.select %307, %308, %304 : vector<1x128xi1>, vector<1x128xf32>
    %310 = arith.subf %196, %204 : f32
    %c14_i32 = arith.constant 14 : i32
    %311 = vector.broadcast %c14_i32 : i32 to vector<1x128xi32>
    %312 = arith.cmpi eq, %5, %311 : vector<1x128xi32>
    %313 = vector.broadcast %310 : f32 to vector<1x128xf32>
    %314 = arith.select %312, %313, %309 : vector<1x128xi1>, vector<1x128xf32>
    %315 = arith.subf %204, %212 : f32
    %c15_i32 = arith.constant 15 : i32
    %316 = vector.broadcast %c15_i32 : i32 to vector<1x128xi32>
    %317 = arith.cmpi eq, %5, %316 : vector<1x128xi32>
    %318 = vector.broadcast %315 : f32 to vector<1x128xf32>
    %319 = arith.select %317, %318, %314 : vector<1x128xi1>, vector<1x128xf32>
    %320 = arith.subf %212, %220 : f32
    %c16_i32 = arith.constant 16 : i32
    %321 = vector.broadcast %c16_i32 : i32 to vector<1x128xi32>
    %322 = arith.cmpi eq, %5, %321 : vector<1x128xi32>
    %323 = vector.broadcast %320 : f32 to vector<1x128xf32>
    %324 = arith.select %322, %323, %319 : vector<1x128xi1>, vector<1x128xf32>
    %325 = arith.subf %220, %228 : f32
    %c17_i32 = arith.constant 17 : i32
    %326 = vector.broadcast %c17_i32 : i32 to vector<1x128xi32>
    %327 = arith.cmpi eq, %5, %326 : vector<1x128xi32>
    %328 = vector.broadcast %325 : f32 to vector<1x128xf32>
    %329 = arith.select %327, %328, %324 : vector<1x128xi1>, vector<1x128xf32>
    %330 = arith.subf %228, %236 : f32
    %c18_i32 = arith.constant 18 : i32
    %331 = vector.broadcast %c18_i32 : i32 to vector<1x128xi32>
    %332 = arith.cmpi eq, %5, %331 : vector<1x128xi32>
    %333 = vector.broadcast %330 : f32 to vector<1x128xf32>
    %334 = arith.select %332, %333, %329 : vector<1x128xi1>, vector<1x128xf32>
    %335 = arith.subf %236, %244 : f32
    %c19_i32 = arith.constant 19 : i32
    %336 = vector.broadcast %c19_i32 : i32 to vector<1x128xi32>
    %337 = arith.cmpi eq, %5, %336 : vector<1x128xi32>
    %338 = vector.broadcast %335 : f32 to vector<1x128xf32>
    %339 = arith.select %337, %338, %334 : vector<1x128xi1>, vector<1x128xf32>
    %c20_i32 = arith.constant 20 : i32
    %340 = vector.broadcast %c20_i32 : i32 to vector<1x128xi32>
    %341 = arith.cmpi eq, %5, %340 : vector<1x128xi32>
    %342 = vector.broadcast %244 : f32 to vector<1x128xf32>
    %343 = arith.select %341, %342, %339 : vector<1x128xi1>, vector<1x128xf32>
    %c0_97 = arith.constant 0 : index
    %c0_98 = arith.constant 0 : index
    %c0_99 = arith.constant 0 : index
    %c0_100 = arith.constant 0 : index
    %344 = vector.load %arg6[%c0_97, %c0_98, %c0_99, %c0_100] : memref<2x1x1x128xf32, #tpu.memory_space<vmem>>, vector<1x1x1x128xf32>
    %345 = vector.shape_cast %344 : vector<1x1x1x128xf32> to vector<1x1x128xf32>
    %346 = vector.shape_cast %343 : vector<1x128xf32> to vector<1x1x128xf32>
    %347 = arith.addf %345, %346 : vector<1x1x128xf32>
    %c0_101 = arith.constant 0 : index
    %c0_102 = arith.constant 0 : index
    %c0_103 = arith.constant 0 : index
    %c0_104 = arith.constant 0 : index
    %348 = vector.load %arg6[%c0_101, %c0_102, %c0_103, %c0_104] : memref<2x1x1x128xf32, #tpu.memory_space<vmem>>, vector<1x1x1x128xf32>
    %349 = vector.shape_cast %348 : vector<1x1x1x128xf32> to vector<1x1x128xf32>
    %350 = vector.shape_cast %347 : vector<1x1x128xf32> to vector<1x1x1x128xf32>
    tpu.vector_store %arg6[%c0_101, %c0_102, %c0_103, %c0_104], %350 {strides = array<i32>} : memref<2x1x1x128xf32, #tpu.memory_space<vmem>>, vector<1x1x1x128xf32>,
    %c0_105 = arith.constant 0 : index
    %c0_106 = arith.constant 0 : index
    %c0_107 = arith.constant 0 : index
    %c0_108 = arith.constant 0 : index
    %351 = vector.load %arg3[%c0_105, %c0_106, %c0_107, %c0_108] : memref<1x3x16x16xf32, #tpu.memory_space<vmem>>, vector<1x3x16x16xf32>
    %352 = vector.extract_strided_slice %351 {offsets = [0, 0, 0, 0], sizes = [1, 1, 16, 16], strides = [1, 1, 1, 1]} : vector<1x3x16x16xf32> to vector<1x1x16x16xf32>
    %353 = vector.shape_cast %352 : vector<1x1x16x16xf32> to vector<16x16xf32>
    %354 = vector.extract_strided_slice %351 {offsets = [0, 1, 0, 0], sizes = [1, 1, 16, 16], strides = [1, 1, 1, 1]} : vector<1x3x16x16xf32> to vector<1x1x16x16xf32>
    %355 = vector.shape_cast %354 : vector<1x1x16x16xf32> to vector<16x16xf32>
    %356 = vector.extract_strided_slice %351 {offsets = [0, 2, 0, 0], sizes = [1, 1, 16, 16], strides = [1, 1, 1, 1]} : vector<1x3x16x16xf32> to vector<1x1x16x16xf32>
    %357 = vector.shape_cast %356 : vector<1x1x16x16xf32> to vector<16x16xf32>
    %cst_109 = arith.constant 9.99999997E-7 : f32
    %358 = vector.broadcast %cst_109 : f32 to vector<16x16xf32>
    %359 = arith.maximumf %353, %358 : vector<16x16xf32>
    %360 = math.log %359 : vector<16x16xf32>
    %cst_110 = arith.constant -0.0723824129 : f32
    %361 = vector.broadcast %cst_110 : f32 to vector<16x16xf32>
    %362 = arith.mulf %360, %361 : vector<16x16xf32>
    %cst_111 = arith.constant 9.99999997E-7 : f32
    %363 = vector.broadcast %cst_111 : f32 to vector<16x16xf32>
    %364 = arith.maximumf %355, %363 : vector<16x16xf32>
    %365 = math.log %364 : vector<16x16xf32>
    %cst_112 = arith.constant -0.0723824129 : f32
    %366 = vector.broadcast %cst_112 : f32 to vector<16x16xf32>
    %367 = arith.mulf %365, %366 : vector<16x16xf32>
    %cst_113 = arith.constant 9.99999997E-7 : f32
    %368 = vector.broadcast %cst_113 : f32 to vector<16x16xf32>
    %369 = arith.maximumf %357, %368 : vector<16x16xf32>
    %370 = math.log %369 : vector<16x16xf32>
    %cst_114 = arith.constant -0.0723824129 : f32
    %371 = vector.broadcast %cst_114 : f32 to vector<16x16xf32>
    %372 = arith.mulf %370, %371 : vector<16x16xf32>
    %cst_115 = arith.constant -0.556115866 : f32
    %373 = vector.broadcast %cst_115 : f32 to vector<16x16xf32>
    %374 = arith.mulf %362, %373 : vector<16x16xf32>
    %cst_116 = arith.constant -0.135521799 : f32
    %375 = vector.broadcast %cst_116 : f32 to vector<16x16xf32>
    %376 = arith.mulf %367, %375 : vector<16x16xf32>
    %377 = arith.addf %374, %376 : vector<16x16xf32>
    %cst_117 = arith.constant 1.57358813 : f32
    %378 = vector.broadcast %cst_117 : f32 to vector<16x16xf32>
    %379 = arith.mulf %372, %378 : vector<16x16xf32>
    %380 = arith.addf %377, %379 : vector<16x16xf32>
    %cst_118 = arith.constant 0.000000e+00 : f32
    %381 = vector.broadcast %cst_118 : f32 to vector<16x16xf32>
    %382 = arith.maximumf %380, %381 : vector<16x16xf32>
    %cst_119 = arith.constant -3.73018789 : f32
    %383 = vector.broadcast %cst_119 : f32 to vector<16x16xf32>
    %384 = arith.mulf %383, %382 : vector<16x16xf32>
    %385 = math.exp %384 : vector<16x16xf32>
    %cst_120 = arith.constant 2.125000e-01 : f32
    %386 = vector.broadcast %cst_120 : f32 to vector<16x16xf32>
    %387 = arith.mulf %385, %386 : vector<16x16xf32>
    %cst_121 = arith.constant -7.87484073 : f32
    %388 = vector.broadcast %cst_121 : f32 to vector<16x16xf32>
    %389 = arith.mulf %388, %382 : vector<16x16xf32>
    %390 = math.exp %389 : vector<16x16xf32>
    %cst_122 = arith.constant 7.154000e-01 : f32
    %391 = vector.broadcast %cst_122 : f32 to vector<16x16xf32>
    %392 = arith.mulf %390, %391 : vector<16x16xf32>
    %393 = arith.addf %387, %392 : vector<16x16xf32>
    %cst_123 = arith.constant -10.7760983 : f32
    %394 = vector.broadcast %cst_123 : f32 to vector<16x16xf32>
    %395 = arith.mulf %394, %382 : vector<16x16xf32>
    %396 = math.exp %395 : vector<16x16xf32>
    %cst_124 = arith.constant 7.210000e-02 : f32
    %397 = vector.broadcast %cst_124 : f32 to vector<16x16xf32>
    %398 = arith.mulf %396, %397 : vector<16x16xf32>
    %399 = arith.addf %393, %398 : vector<16x16xf32>
    %cst_125 = arith.constant 0.0180755276 : f32
    %400 = vector.broadcast %cst_125 : f32 to vector<16x16xf32>
    %401 = arith.addf %399, %400 : vector<16x16xf32>
    %402 = math.log %401 : vector<16x16xf32>
    %cst_126 = arith.constant -0.434294492 : f32
    %403 = vector.broadcast %cst_126 : f32 to vector<16x16xf32>
    %404 = arith.mulf %402, %403 : vector<16x16xf32>
    %cst_127 = arith.constant 0.000000e+00 : f32
    %405 = vector.broadcast %cst_127 : f32 to vector<16x16xf32>
    %406 = arith.maximumf %404, %405 : vector<16x16xf32>
    %cst_128 = arith.constant 0.000000e+00 : f32
    %407 = vector.broadcast %cst_128 : f32 to vector<16x16xf32>
    %408 = arith.cmpf ogt, %406, %407 : vector<16x16xf32>
    %cst_129 = arith.constant 1.000000e-30 : f32
    %409 = vector.broadcast %cst_129 : f32 to vector<16x16xf32>
    %410 = arith.maximumf %406, %409 : vector<16x16xf32>
    %411 = math.log %410 : vector<16x16xf32>
    %cst_130 = arith.constant 1.800000e+00 : f32
    %412 = vector.broadcast %cst_130 : f32 to vector<16x16xf32>
    %413 = arith.mulf %412, %411 : vector<16x16xf32>
    %414 = math.exp %413 : vector<16x16xf32>
    %cst_131 = arith.constant 0.000000e+00 : f32
    %415 = vector.broadcast %cst_131 : f32 to vector<16x16xf32>
    %416 = arith.select %408, %414, %415 : vector<16x16xi1>, vector<16x16xf32>
    %cst_132 = arith.constant 1.500000e-01 : f32
    %417 = vector.broadcast %cst_132 : f32 to vector<16x16xf32>
    %418 = arith.cmpf olt, %416, %417 : vector<16x16xf32>
    %cst_133 = arith.constant 0.000000e+00 : f32
    %419 = vector.broadcast %cst_133 : f32 to vector<16x16xf32>
    %420 = arith.select %418, %419, %416 : vector<16x16xi1>, vector<16x16xf32>
    %cst_134 = arith.constant 6.800000e-01 : f32
    %421 = vector.broadcast %cst_134 : f32 to vector<16x16xf32>
    %422 = arith.cmpf oge, %416, %421 : vector<16x16xf32>
    %423 = arith.extui %422 : vector<16x16xi1> to vector<16x16xi32>
    %424 = arith.sitofp %423 : vector<16x16xi32> to vector<16x16xf32>
    %425 = arith.truncf %424 : vector<16x16xf32> to vector<16x16xbf16>
    %426 = vector.shape_cast %425 : vector<16x16xbf16> to vector<1x16x16xbf16>
    %c1 = arith.constant 1 : index
    %c0_135 = arith.constant 0 : index
    %c0_136 = arith.constant 0 : index
    %c0_137 = arith.constant 0 : index
    %427 = vector.load %arg7[%c1, %c0_135, %c0_136, %c0_137] : memref<2x1x16x16xbf16, #tpu.memory_space<vmem>>, vector<1x1x16x16xbf16>
    %428 = vector.shape_cast %427 : vector<1x1x16x16xbf16> to vector<1x16x16xbf16>
    %429 = vector.shape_cast %426 : vector<1x16x16xbf16> to vector<1x1x16x16xbf16>
    tpu.vector_store %arg7[%c1, %c0_135, %c0_136, %c0_137], %429 {strides = array<i32>} : memref<2x1x16x16xbf16, #tpu.memory_space<vmem>>, vector<1x1x16x16xbf16>,
    %cst_138 = arith.constant dense<0.000000e+00> : vector<16x128xf32>
    %430 = tpu.matmul %420, %3, %cst_138 {dimension_numbers = #tpu.dot_dimension_numbers<[1], [0], [0], [1], [0, 0, 1, 1], [], []>} : vector<16x16xf32>, vector<16x128xf32>, vector<16x128xf32> -> vector<16x128xf32>
    %431 = arith.mulf %430, %4 : vector<16x128xf32>
    %cst_139 = arith.constant dense<0.000000e+00> : vector<128xf32>
    %432 = vector.multi_reduction <add>, %431, %cst_139 [0] : vector<16x128xf32> to vector<128xf32>
    %433 = vector.shape_cast %432 : vector<128xf32> to vector<1x128xf32>
    %434 = vector.shape_cast %416 : vector<16x16xf32> to vector<1x16x16xf32>
    %cst_140 = arith.constant dense<0.000000e+00> : vector<1xf32>
    %435 = vector.multi_reduction <add>, %434, %cst_140 [1, 2] : vector<1x16x16xf32> to vector<1xf32>
    %436 = vector.shape_cast %435 : vector<1xf32> to vector<1x1x1xf32>
    %437 = vector.extract %436[0, 0, 0] : f32 from vector<1x1x1xf32>
    %cst_141 = arith.constant 0.135914087 : f32
    %438 = vector.broadcast %cst_141 : f32 to vector<16x16xf32>
    %439 = arith.cmpf oge, %416, %438 : vector<16x16xf32>
    %cst_142 = arith.constant 0.000000e+00 : f32
    %440 = vector.broadcast %cst_142 : f32 to vector<16x16xf32>
    %441 = arith.select %439, %416, %440 : vector<16x16xi1>, vector<16x16xf32>
    %442 = vector.shape_cast %441 : vector<16x16xf32> to vector<1x16x16xf32>
    %cst_143 = arith.constant dense<0.000000e+00> : vector<1xf32>
    %443 = vector.multi_reduction <add>, %442, %cst_143 [1, 2] : vector<1x16x16xf32> to vector<1xf32>
    %444 = vector.shape_cast %443 : vector<1xf32> to vector<1x1x1xf32>
    %445 = vector.extract %444[0, 0, 0] : f32 from vector<1x1x1xf32>
    %cst_144 = arith.constant 0.271828175 : f32
    %446 = vector.broadcast %cst_144 : f32 to vector<16x16xf32>
    %447 = arith.cmpf oge, %416, %446 : vector<16x16xf32>
    %cst_145 = arith.constant 0.000000e+00 : f32
    %448 = vector.broadcast %cst_145 : f32 to vector<16x16xf32>
    %449 = arith.select %447, %416, %448 : vector<16x16xi1>, vector<16x16xf32>
    %450 = vector.shape_cast %449 : vector<16x16xf32> to vector<1x16x16xf32>
    %cst_146 = arith.constant dense<0.000000e+00> : vector<1xf32>
    %451 = vector.multi_reduction <add>, %450, %cst_146 [1, 2] : vector<1x16x16xf32> to vector<1xf32>
    %452 = vector.shape_cast %451 : vector<1xf32> to vector<1x1x1xf32>
    %453 = vector.extract %452[0, 0, 0] : f32 from vector<1x1x1xf32>
    %cst_147 = arith.constant 0.407742262 : f32
    %454 = vector.broadcast %cst_147 : f32 to vector<16x16xf32>
    %455 = arith.cmpf oge, %416, %454 : vector<16x16xf32>
    %cst_148 = arith.constant 0.000000e+00 : f32
    %456 = vector.broadcast %cst_148 : f32 to vector<16x16xf32>
    %457 = arith.select %455, %416, %456 : vector<16x16xi1>, vector<16x16xf32>
    %458 = vector.shape_cast %457 : vector<16x16xf32> to vector<1x16x16xf32>
    %cst_149 = arith.constant dense<0.000000e+00> : vector<1xf32>
    %459 = vector.multi_reduction <add>, %458, %cst_149 [1, 2] : vector<1x16x16xf32> to vector<1xf32>
    %460 = vector.shape_cast %459 : vector<1xf32> to vector<1x1x1xf32>
    %461 = vector.extract %460[0, 0, 0] : f32 from vector<1x1x1xf32>
    %cst_150 = arith.constant 0.543656349 : f32
    %462 = vector.broadcast %cst_150 : f32 to vector<16x16xf32>
    %463 = arith.cmpf oge, %416, %462 : vector<16x16xf32>
    %cst_151 = arith.constant 0.000000e+00 : f32
    %464 = vector.broadcast %cst_151 : f32 to vector<16x16xf32>
    %465 = arith.select %463, %416, %464 : vector<16x16xi1>, vector<16x16xf32>
    %466 = vector.shape_cast %465 : vector<16x16xf32> to vector<1x16x16xf32>
    %cst_152 = arith.constant dense<0.000000e+00> : vector<1xf32>
    %467 = vector.multi_reduction <add>, %466, %cst_152 [1, 2] : vector<1x16x16xf32> to vector<1xf32>
    %468 = vector.shape_cast %467 : vector<1xf32> to vector<1x1x1xf32>
    %469 = vector.extract %468[0, 0, 0] : f32 from vector<1x1x1xf32>
    %cst_153 = arith.constant 0.679570436 : f32
    %470 = vector.broadcast %cst_153 : f32 to vector<16x16xf32>
    %471 = arith.cmpf oge, %416, %470 : vector<16x16xf32>
    %cst_154 = arith.constant 0.000000e+00 : f32
    %472 = vector.broadcast %cst_154 : f32 to vector<16x16xf32>
    %473 = arith.select %471, %416, %472 : vector<16x16xi1>, vector<16x16xf32>
    %474 = vector.shape_cast %473 : vector<16x16xf32> to vector<1x16x16xf32>
    %cst_155 = arith.constant dense<0.000000e+00> : vector<1xf32>
    %475 = vector.multi_reduction <add>, %474, %cst_155 [1, 2] : vector<1x16x16xf32> to vector<1xf32>
    %476 = vector.shape_cast %475 : vector<1xf32> to vector<1x1x1xf32>
    %477 = vector.extract %476[0, 0, 0] : f32 from vector<1x1x1xf32>
    %cst_156 = arith.constant 0.815484523 : f32
    %478 = vector.broadcast %cst_156 : f32 to vector<16x16xf32>
    %479 = arith.cmpf oge, %416, %478 : vector<16x16xf32>
    %cst_157 = arith.constant 0.000000e+00 : f32
    %480 = vector.broadcast %cst_157 : f32 to vector<16x16xf32>
    %481 = arith.select %479, %416, %480 : vector<16x16xi1>, vector<16x16xf32>
    %482 = vector.shape_cast %481 : vector<16x16xf32> to vector<1x16x16xf32>
    %cst_158 = arith.constant dense<0.000000e+00> : vector<1xf32>
    %483 = vector.multi_reduction <add>, %482, %cst_158 [1, 2] : vector<1x16x16xf32> to vector<1xf32>
    %484 = vector.shape_cast %483 : vector<1xf32> to vector<1x1x1xf32>
    %485 = vector.extract %484[0, 0, 0] : f32 from vector<1x1x1xf32>
    %cst_159 = arith.constant 0.951398611 : f32
    %486 = vector.broadcast %cst_159 : f32 to vector<16x16xf32>
    %487 = arith.cmpf oge, %416, %486 : vector<16x16xf32>
    %cst_160 = arith.constant 0.000000e+00 : f32
    %488 = vector.broadcast %cst_160 : f32 to vector<16x16xf32>
    %489 = arith.select %487, %416, %488 : vector<16x16xi1>, vector<16x16xf32>
    %490 = vector.shape_cast %489 : vector<16x16xf32> to vector<1x16x16xf32>
    %cst_161 = arith.constant dense<0.000000e+00> : vector<1xf32>
    %491 = vector.multi_reduction <add>, %490, %cst_161 [1, 2] : vector<1x16x16xf32> to vector<1xf32>
    %492 = vector.shape_cast %491 : vector<1xf32> to vector<1x1x1xf32>
    %493 = vector.extract %492[0, 0, 0] : f32 from vector<1x1x1xf32>
    %cst_162 = arith.constant 1.0873127 : f32
    %494 = vector.broadcast %cst_162 : f32 to vector<16x16xf32>
    %495 = arith.cmpf oge, %416, %494 : vector<16x16xf32>
    %cst_163 = arith.constant 0.000000e+00 : f32
    %496 = vector.broadcast %cst_163 : f32 to vector<16x16xf32>
    %497 = arith.select %495, %416, %496 : vector<16x16xi1>, vector<16x16xf32>
    %498 = vector.shape_cast %497 : vector<16x16xf32> to vector<1x16x16xf32>
    %cst_164 = arith.constant dense<0.000000e+00> : vector<1xf32>
    %499 = vector.multi_reduction <add>, %498, %cst_164 [1, 2] : vector<1x16x16xf32> to vector<1xf32>
    %500 = vector.shape_cast %499 : vector<1xf32> to vector<1x1x1xf32>
    %501 = vector.extract %500[0, 0, 0] : f32 from vector<1x1x1xf32>
    %cst_165 = arith.constant 1.22322679 : f32
    %502 = vector.broadcast %cst_165 : f32 to vector<16x16xf32>
    %503 = arith.cmpf oge, %416, %502 : vector<16x16xf32>
    %cst_166 = arith.constant 0.000000e+00 : f32
    %504 = vector.broadcast %cst_166 : f32 to vector<16x16xf32>
    %505 = arith.select %503, %416, %504 : vector<16x16xi1>, vector<16x16xf32>
    %506 = vector.shape_cast %505 : vector<16x16xf32> to vector<1x16x16xf32>
    %cst_167 = arith.constant dense<0.000000e+00> : vector<1xf32>
    %507 = vector.multi_reduction <add>, %506, %cst_167 [1, 2] : vector<1x16x16xf32> to vector<1xf32>
    %508 = vector.shape_cast %507 : vector<1xf32> to vector<1x1x1xf32>
    %509 = vector.extract %508[0, 0, 0] : f32 from vector<1x1x1xf32>
    %cst_168 = arith.constant 1.35914087 : f32
    %510 = vector.broadcast %cst_168 : f32 to vector<16x16xf32>
    %511 = arith.cmpf oge, %416, %510 : vector<16x16xf32>
    %cst_169 = arith.constant 0.000000e+00 : f32
    %512 = vector.broadcast %cst_169 : f32 to vector<16x16xf32>
    %513 = arith.select %511, %416, %512 : vector<16x16xi1>, vector<16x16xf32>
    %514 = vector.shape_cast %513 : vector<16x16xf32> to vector<1x16x16xf32>
    %cst_170 = arith.constant dense<0.000000e+00> : vector<1xf32>
    %515 = vector.multi_reduction <add>, %514, %cst_170 [1, 2] : vector<1x16x16xf32> to vector<1xf32>
    %516 = vector.shape_cast %515 : vector<1xf32> to vector<1x1x1xf32>
    %517 = vector.extract %516[0, 0, 0] : f32 from vector<1x1x1xf32>
    %cst_171 = arith.constant 1.49505496 : f32
    %518 = vector.broadcast %cst_171 : f32 to vector<16x16xf32>
    %519 = arith.cmpf oge, %416, %518 : vector<16x16xf32>
    %cst_172 = arith.constant 0.000000e+00 : f32
    %520 = vector.broadcast %cst_172 : f32 to vector<16x16xf32>
    %521 = arith.select %519, %416, %520 : vector<16x16xi1>, vector<16x16xf32>
    %522 = vector.shape_cast %521 : vector<16x16xf32> to vector<1x16x16xf32>
    %cst_173 = arith.constant dense<0.000000e+00> : vector<1xf32>
    %523 = vector.multi_reduction <add>, %522, %cst_173 [1, 2] : vector<1x16x16xf32> to vector<1xf32>
    %524 = vector.shape_cast %523 : vector<1xf32> to vector<1x1x1xf32>
    %525 = vector.extract %524[0, 0, 0] : f32 from vector<1x1x1xf32>
    %cst_174 = arith.constant 1.63096905 : f32
    %526 = vector.broadcast %cst_174 : f32 to vector<16x16xf32>
    %527 = arith.cmpf oge, %416, %526 : vector<16x16xf32>
    %cst_175 = arith.constant 0.000000e+00 : f32
    %528 = vector.broadcast %cst_175 : f32 to vector<16x16xf32>
    %529 = arith.select %527, %416, %528 : vector<16x16xi1>, vector<16x16xf32>
    %530 = vector.shape_cast %529 : vector<16x16xf32> to vector<1x16x16xf32>
    %cst_176 = arith.constant dense<0.000000e+00> : vector<1xf32>
    %531 = vector.multi_reduction <add>, %530, %cst_176 [1, 2] : vector<1x16x16xf32> to vector<1xf32>
    %532 = vector.shape_cast %531 : vector<1xf32> to vector<1x1x1xf32>
    %533 = vector.extract %532[0, 0, 0] : f32 from vector<1x1x1xf32>
    %cst_177 = arith.constant 1.76688313 : f32
    %534 = vector.broadcast %cst_177 : f32 to vector<16x16xf32>
    %535 = arith.cmpf oge, %416, %534 : vector<16x16xf32>
    %cst_178 = arith.constant 0.000000e+00 : f32
    %536 = vector.broadcast %cst_178 : f32 to vector<16x16xf32>
    %537 = arith.select %535, %416, %536 : vector<16x16xi1>, vector<16x16xf32>
    %538 = vector.shape_cast %537 : vector<16x16xf32> to vector<1x16x16xf32>
    %cst_179 = arith.constant dense<0.000000e+00> : vector<1xf32>
    %539 = vector.multi_reduction <add>, %538, %cst_179 [1, 2] : vector<1x16x16xf32> to vector<1xf32>
    %540 = vector.shape_cast %539 : vector<1xf32> to vector<1x1x1xf32>
    %541 = vector.extract %540[0, 0, 0] : f32 from vector<1x1x1xf32>
    %cst_180 = arith.constant 1.90279722 : f32
    %542 = vector.broadcast %cst_180 : f32 to vector<16x16xf32>
    %543 = arith.cmpf oge, %416, %542 : vector<16x16xf32>
    %cst_181 = arith.constant 0.000000e+00 : f32
    %544 = vector.broadcast %cst_181 : f32 to vector<16x16xf32>
    %545 = arith.select %543, %416, %544 : vector<16x16xi1>, vector<16x16xf32>
    %546 = vector.shape_cast %545 : vector<16x16xf32> to vector<1x16x16xf32>
    %cst_182 = arith.constant dense<0.000000e+00> : vector<1xf32>
    %547 = vector.multi_reduction <add>, %546, %cst_182 [1, 2] : vector<1x16x16xf32> to vector<1xf32>
    %548 = vector.shape_cast %547 : vector<1xf32> to vector<1x1x1xf32>
    %549 = vector.extract %548[0, 0, 0] : f32 from vector<1x1x1xf32>
    %cst_183 = arith.constant 2.03871131 : f32
    %550 = vector.broadcast %cst_183 : f32 to vector<16x16xf32>
    %551 = arith.cmpf oge, %416, %550 : vector<16x16xf32>
    %cst_184 = arith.constant 0.000000e+00 : f32
    %552 = vector.broadcast %cst_184 : f32 to vector<16x16xf32>
    %553 = arith.select %551, %416, %552 : vector<16x16xi1>, vector<16x16xf32>
    %554 = vector.shape_cast %553 : vector<16x16xf32> to vector<1x16x16xf32>
    %cst_185 = arith.constant dense<0.000000e+00> : vector<1xf32>
    %555 = vector.multi_reduction <add>, %554, %cst_185 [1, 2] : vector<1x16x16xf32> to vector<1xf32>
    %556 = vector.shape_cast %555 : vector<1xf32> to vector<1x1x1xf32>
    %557 = vector.extract %556[0, 0, 0] : f32 from vector<1x1x1xf32>
    %cst_186 = arith.constant 2.1746254 : f32
    %558 = vector.broadcast %cst_186 : f32 to vector<16x16xf32>
    %559 = arith.cmpf oge, %416, %558 : vector<16x16xf32>
    %cst_187 = arith.constant 0.000000e+00 : f32
    %560 = vector.broadcast %cst_187 : f32 to vector<16x16xf32>
    %561 = arith.select %559, %416, %560 : vector<16x16xi1>, vector<16x16xf32>
    %562 = vector.shape_cast %561 : vector<16x16xf32> to vector<1x16x16xf32>
    %cst_188 = arith.constant dense<0.000000e+00> : vector<1xf32>
    %563 = vector.multi_reduction <add>, %562, %cst_188 [1, 2] : vector<1x16x16xf32> to vector<1xf32>
    %564 = vector.shape_cast %563 : vector<1xf32> to vector<1x1x1xf32>
    %565 = vector.extract %564[0, 0, 0] : f32 from vector<1x1x1xf32>
    %cst_189 = arith.constant 2.31053948 : f32
    %566 = vector.broadcast %cst_189 : f32 to vector<16x16xf32>
    %567 = arith.cmpf oge, %416, %566 : vector<16x16xf32>
    %cst_190 = arith.constant 0.000000e+00 : f32
    %568 = vector.broadcast %cst_190 : f32 to vector<16x16xf32>
    %569 = arith.select %567, %416, %568 : vector<16x16xi1>, vector<16x16xf32>
    %570 = vector.shape_cast %569 : vector<16x16xf32> to vector<1x16x16xf32>
    %cst_191 = arith.constant dense<0.000000e+00> : vector<1xf32>
    %571 = vector.multi_reduction <add>, %570, %cst_191 [1, 2] : vector<1x16x16xf32> to vector<1xf32>
    %572 = vector.shape_cast %571 : vector<1xf32> to vector<1x1x1xf32>
    %573 = vector.extract %572[0, 0, 0] : f32 from vector<1x1x1xf32>
    %cst_192 = arith.constant 2.44645357 : f32
    %574 = vector.broadcast %cst_192 : f32 to vector<16x16xf32>
    %575 = arith.cmpf oge, %416, %574 : vector<16x16xf32>
    %cst_193 = arith.constant 0.000000e+00 : f32
    %576 = vector.broadcast %cst_193 : f32 to vector<16x16xf32>
    %577 = arith.select %575, %416, %576 : vector<16x16xi1>, vector<16x16xf32>
    %578 = vector.shape_cast %577 : vector<16x16xf32> to vector<1x16x16xf32>
    %cst_194 = arith.constant dense<0.000000e+00> : vector<1xf32>
    %579 = vector.multi_reduction <add>, %578, %cst_194 [1, 2] : vector<1x16x16xf32> to vector<1xf32>
    %580 = vector.shape_cast %579 : vector<1xf32> to vector<1x1x1xf32>
    %581 = vector.extract %580[0, 0, 0] : f32 from vector<1x1x1xf32>
    %cst_195 = arith.constant 2.58236766 : f32
    %582 = vector.broadcast %cst_195 : f32 to vector<16x16xf32>
    %583 = arith.cmpf oge, %416, %582 : vector<16x16xf32>
    %cst_196 = arith.constant 0.000000e+00 : f32
    %584 = vector.broadcast %cst_196 : f32 to vector<16x16xf32>
    %585 = arith.select %583, %416, %584 : vector<16x16xi1>, vector<16x16xf32>
    %586 = vector.shape_cast %585 : vector<16x16xf32> to vector<1x16x16xf32>
    %cst_197 = arith.constant dense<0.000000e+00> : vector<1xf32>
    %587 = vector.multi_reduction <add>, %586, %cst_197 [1, 2] : vector<1x16x16xf32> to vector<1xf32>
    %588 = vector.shape_cast %587 : vector<1xf32> to vector<1x1x1xf32>
    %589 = vector.extract %588[0, 0, 0] : f32 from vector<1x1x1xf32>
    %590 = arith.subf %437, %445 : f32
    %c1_i32_198 = arith.constant 1 : i32
    %591 = vector.broadcast %c1_i32_198 : i32 to vector<1x128xi32>
    %592 = arith.cmpi eq, %5, %591 : vector<1x128xi32>
    %593 = vector.broadcast %590 : f32 to vector<1x128xf32>
    %594 = arith.select %592, %593, %433 : vector<1x128xi1>, vector<1x128xf32>
    %595 = arith.subf %445, %453 : f32
    %c2_i32_199 = arith.constant 2 : i32
    %596 = vector.broadcast %c2_i32_199 : i32 to vector<1x128xi32>
    %597 = arith.cmpi eq, %5, %596 : vector<1x128xi32>
    %598 = vector.broadcast %595 : f32 to vector<1x128xf32>
    %599 = arith.select %597, %598, %594 : vector<1x128xi1>, vector<1x128xf32>
    %600 = arith.subf %453, %461 : f32
    %c3_i32_200 = arith.constant 3 : i32
    %601 = vector.broadcast %c3_i32_200 : i32 to vector<1x128xi32>
    %602 = arith.cmpi eq, %5, %601 : vector<1x128xi32>
    %603 = vector.broadcast %600 : f32 to vector<1x128xf32>
    %604 = arith.select %602, %603, %599 : vector<1x128xi1>, vector<1x128xf32>
    %605 = arith.subf %461, %469 : f32
    %c4_i32_201 = arith.constant 4 : i32
    %606 = vector.broadcast %c4_i32_201 : i32 to vector<1x128xi32>
    %607 = arith.cmpi eq, %5, %606 : vector<1x128xi32>
    %608 = vector.broadcast %605 : f32 to vector<1x128xf32>
    %609 = arith.select %607, %608, %604 : vector<1x128xi1>, vector<1x128xf32>
    %610 = arith.subf %469, %477 : f32
    %c5_i32_202 = arith.constant 5 : i32
    %611 = vector.broadcast %c5_i32_202 : i32 to vector<1x128xi32>
    %612 = arith.cmpi eq, %5, %611 : vector<1x128xi32>
    %613 = vector.broadcast %610 : f32 to vector<1x128xf32>
    %614 = arith.select %612, %613, %609 : vector<1x128xi1>, vector<1x128xf32>
    %615 = arith.subf %477, %485 : f32
    %c6_i32_203 = arith.constant 6 : i32
    %616 = vector.broadcast %c6_i32_203 : i32 to vector<1x128xi32>
    %617 = arith.cmpi eq, %5, %616 : vector<1x128xi32>
    %618 = vector.broadcast %615 : f32 to vector<1x128xf32>
    %619 = arith.select %617, %618, %614 : vector<1x128xi1>, vector<1x128xf32>
    %620 = arith.subf %485, %493 : f32
    %c7_i32_204 = arith.constant 7 : i32
    %621 = vector.broadcast %c7_i32_204 : i32 to vector<1x128xi32>
    %622 = arith.cmpi eq, %5, %621 : vector<1x128xi32>
    %623 = vector.broadcast %620 : f32 to vector<1x128xf32>
    %624 = arith.select %622, %623, %619 : vector<1x128xi1>, vector<1x128xf32>
    %625 = arith.subf %493, %501 : f32
    %c8_i32_205 = arith.constant 8 : i32
    %626 = vector.broadcast %c8_i32_205 : i32 to vector<1x128xi32>
    %627 = arith.cmpi eq, %5, %626 : vector<1x128xi32>
    %628 = vector.broadcast %625 : f32 to vector<1x128xf32>
    %629 = arith.select %627, %628, %624 : vector<1x128xi1>, vector<1x128xf32>
    %630 = arith.subf %501, %509 : f32
    %c9_i32_206 = arith.constant 9 : i32
    %631 = vector.broadcast %c9_i32_206 : i32 to vector<1x128xi32>
    %632 = arith.cmpi eq, %5, %631 : vector<1x128xi32>
    %633 = vector.broadcast %630 : f32 to vector<1x128xf32>
    %634 = arith.select %632, %633, %629 : vector<1x128xi1>, vector<1x128xf32>
    %635 = arith.subf %509, %517 : f32
    %c10_i32_207 = arith.constant 10 : i32
    %636 = vector.broadcast %c10_i32_207 : i32 to vector<1x128xi32>
    %637 = arith.cmpi eq, %5, %636 : vector<1x128xi32>
    %638 = vector.broadcast %635 : f32 to vector<1x128xf32>
    %639 = arith.select %637, %638, %634 : vector<1x128xi1>, vector<1x128xf32>
    %640 = arith.subf %517, %525 : f32
    %c11_i32_208 = arith.constant 11 : i32
    %641 = vector.broadcast %c11_i32_208 : i32 to vector<1x128xi32>
    %642 = arith.cmpi eq, %5, %641 : vector<1x128xi32>
    %643 = vector.broadcast %640 : f32 to vector<1x128xf32>
    %644 = arith.select %642, %643, %639 : vector<1x128xi1>, vector<1x128xf32>
    %645 = arith.subf %525, %533 : f32
    %c12_i32_209 = arith.constant 12 : i32
    %646 = vector.broadcast %c12_i32_209 : i32 to vector<1x128xi32>
    %647 = arith.cmpi eq, %5, %646 : vector<1x128xi32>
    %648 = vector.broadcast %645 : f32 to vector<1x128xf32>
    %649 = arith.select %647, %648, %644 : vector<1x128xi1>, vector<1x128xf32>
    %650 = arith.subf %533, %541 : f32
    %c13_i32_210 = arith.constant 13 : i32
    %651 = vector.broadcast %c13_i32_210 : i32 to vector<1x128xi32>
    %652 = arith.cmpi eq, %5, %651 : vector<1x128xi32>
    %653 = vector.broadcast %650 : f32 to vector<1x128xf32>
    %654 = arith.select %652, %653, %649 : vector<1x128xi1>, vector<1x128xf32>
    %655 = arith.subf %541, %549 : f32
    %c14_i32_211 = arith.constant 14 : i32
    %656 = vector.broadcast %c14_i32_211 : i32 to vector<1x128xi32>
    %657 = arith.cmpi eq, %5, %656 : vector<1x128xi32>
    %658 = vector.broadcast %655 : f32 to vector<1x128xf32>
    %659 = arith.select %657, %658, %654 : vector<1x128xi1>, vector<1x128xf32>
    %660 = arith.subf %549, %557 : f32
    %c15_i32_212 = arith.constant 15 : i32
    %661 = vector.broadcast %c15_i32_212 : i32 to vector<1x128xi32>
    %662 = arith.cmpi eq, %5, %661 : vector<1x128xi32>
    %663 = vector.broadcast %660 : f32 to vector<1x128xf32>
    %664 = arith.select %662, %663, %659 : vector<1x128xi1>, vector<1x128xf32>
    %665 = arith.subf %557, %565 : f32
    %c16_i32_213 = arith.constant 16 : i32
    %666 = vector.broadcast %c16_i32_213 : i32 to vector<1x128xi32>
    %667 = arith.cmpi eq, %5, %666 : vector<1x128xi32>
    %668 = vector.broadcast %665 : f32 to vector<1x128xf32>
    %669 = arith.select %667, %668, %664 : vector<1x128xi1>, vector<1x128xf32>
    %670 = arith.subf %565, %573 : f32
    %c17_i32_214 = arith.constant 17 : i32
    %671 = vector.broadcast %c17_i32_214 : i32 to vector<1x128xi32>
    %672 = arith.cmpi eq, %5, %671 : vector<1x128xi32>
    %673 = vector.broadcast %670 : f32 to vector<1x128xf32>
    %674 = arith.select %672, %673, %669 : vector<1x128xi1>, vector<1x128xf32>
    %675 = arith.subf %573, %581 : f32
    %c18_i32_215 = arith.constant 18 : i32
    %676 = vector.broadcast %c18_i32_215 : i32 to vector<1x128xi32>
    %677 = arith.cmpi eq, %5, %676 : vector<1x128xi32>
    %678 = vector.broadcast %675 : f32 to vector<1x128xf32>
    %679 = arith.select %677, %678, %674 : vector<1x128xi1>, vector<1x128xf32>
    %680 = arith.subf %581, %589 : f32
    %c19_i32_216 = arith.constant 19 : i32
    %681 = vector.broadcast %c19_i32_216 : i32 to vector<1x128xi32>
    %682 = arith.cmpi eq, %5, %681 : vector<1x128xi32>
    %683 = vector.broadcast %680 : f32 to vector<1x128xf32>
    %684 = arith.select %682, %683, %679 : vector<1x128xi1>, vector<1x128xf32>
    %c20_i32_217 = arith.constant 20 : i32
    %685 = vector.broadcast %c20_i32_217 : i32 to vector<1x128xi32>
    %686 = arith.cmpi eq, %5, %685 : vector<1x128xi32>
    %687 = vector.broadcast %589 : f32 to vector<1x128xf32>
    %688 = arith.select %686, %687, %684 : vector<1x128xi1>, vector<1x128xf32>
    %c1_218 = arith.constant 1 : index
    %c0_219 = arith.constant 0 : index
    %c0_220 = arith.constant 0 : index
    %c0_221 = arith.constant 0 : index
    %689 = vector.load %arg6[%c1_218, %c0_219, %c0_220, %c0_221] : memref<2x1x1x128xf32, #tpu.memory_space<vmem>>, vector<1x1x1x128xf32>
    %690 = vector.shape_cast %689 : vector<1x1x1x128xf32> to vector<1x1x128xf32>
    %691 = vector.shape_cast %688 : vector<1x128xf32> to vector<1x1x128xf32>
    %692 = arith.addf %690, %691 : vector<1x1x128xf32>
    %c1_222 = arith.constant 1 : index
    %c0_223 = arith.constant 0 : index
    %c0_224 = arith.constant 0 : index
    %c0_225 = arith.constant 0 : index
    %693 = vector.load %arg6[%c1_222, %c0_223, %c0_224, %c0_225] : memref<2x1x1x128xf32, #tpu.memory_space<vmem>>, vector<1x1x1x128xf32>
    %694 = vector.shape_cast %693 : vector<1x1x1x128xf32> to vector<1x1x128xf32>
    %695 = vector.shape_cast %692 : vector<1x1x128xf32> to vector<1x1x1x128xf32>
    tpu.vector_store %arg6[%c1_222, %c0_223, %c0_224, %c0_225], %695 {strides = array<i32>} : memref<2x1x1x128xf32, #tpu.memory_space<vmem>>, vector<1x1x1x128xf32>,
    return
  }
  func.func @transform_0(%arg0: i32, %arg1: i32) -> (i32, i32, i32, i32) {
    %c0_i32 = arith.constant 0 : i32
    %c0_i32_0 = arith.constant 0 : i32
    %c0_i32_1 = arith.constant 0 : i32
    return %arg0, %c0_i32, %arg1, %c0_i32_0 : i32, i32, i32, i32
  }
  func.func @transform_1(%arg0: i32, %arg1: i32) -> (i32, i32, i32, i32) {
    %c0_i32 = arith.constant 0 : i32
    %c0_i32_0 = arith.constant 0 : i32
    %c0_i32_1 = arith.constant 0 : i32
    return %arg0, %c0_i32, %arg1, %c0_i32_0 : i32, i32, i32, i32
  }
  func.func @transform_2(%arg0: i32, %arg1: i32) -> (i32, i32) {
    %c0_i32 = arith.constant 0 : i32
    %c0_i32_0 = arith.constant 0 : i32
    %c0_i32_1 = arith.constant 0 : i32
    return %c0_i32, %c0_i32_0 : i32, i32
  }
  func.func @transform_3(%arg0: i32, %arg1: i32) -> (i32, i32) {
    %c0_i32 = arith.constant 0 : i32
    %c0_i32_0 = arith.constant 0 : i32
    return %arg1, %c0_i32 : i32, i32
  }
  func.func @transform_4(%arg0: i32, %arg1: i32) -> (i32, i32, i32, i32) {
    %c0_i32 = arith.constant 0 : i32
    %c0_i32_0 = arith.constant 0 : i32
    %c0_i32_1 = arith.constant 0 : i32
    %c0_i32_2 = arith.constant 0 : i32
    return %c0_i32, %arg0, %c0_i32_0, %c0_i32_1 : i32, i32, i32, i32
  }
  func.func @transform_5(%arg0: i32, %arg1: i32) -> (i32, i32, i32, i32) {
    %c0_i32 = arith.constant 0 : i32
    %c0_i32_0 = arith.constant 0 : i32
    %c0_i32_1 = arith.constant 0 : i32
    return %c0_i32, %arg0, %arg1, %c0_i32_0 : i32, i32, i32, i32
  }
}

</mosaic_0001>

<llo_original>
// kernel: _mlpa_loss.1
$region0: #{_mlpa_loss.1}
  #allocation0 [shape = 'u32[]', space=smem, size = 0x4, offset = 0x4, fixed_abs, tag = 'smem constant byte address 0x4 - core index']
  #allocation1 [shape = 'u32[144,128]{1,0:T(1,128)}', space=vmem, size = 0x12000, scoped, tag = 'internal scratch']
  %s0 = inlined_call_operand.hbm [shape: f32[2,3,16,16], index: 0, kind: input, shape index: {}]
  %s1 = inlined_call_operand.hbm [shape: f32[2,3,16,16], index: 1, kind: input, shape index: {}]
  %s2 = inlined_call_operand.hbm [shape: f32[16,128], index: 2, kind: input, shape index: {}]
  %s3 = inlined_call_operand.hbm [shape: f32[16,128], index: 3, kind: input, shape index: {}]
  %s4 = inlined_call_operand.vmem [shape: f32[2,2,1,128], index: 4, kind: output, shape index: {0}]
  %s5 = inlined_call_operand.vmem [shape: bf16[2,2,16,16], index: 5, kind: output, shape index: {1}]
  %6 = xla_tuple %s4, %s5
  %s7 = sld [smem:[#allocation0]]
  $region144: #{_mlpa_loss.1} parent=0
    _
  %s9 = ssub.s32 1, %s7
  %s10 = scalar_select 0, %s9, %s7
  $region1: #{_mlpa_loss.1} parent=0
    #allocation2 [shape = 'u8[49152]{0}', space=vmem, size = 0xc000, scoped, tag = 'input window, operand 0']
    #allocation3 [shape = 's32[2]{0}', space=sflag, size = 0x8, scoped, tag = 'scoped memory for _mlpa_loss.1']
    #allocation4 [shape = 'u8[49152]{0}', space=vmem, size = 0xc000, scoped, tag = 'input window, operand 1']
    #allocation5 [shape = 's32[2]{0}', space=sflag, size = 0x8, scoped, tag = 'scoped memory for _mlpa_loss.1']
    #allocation6 [shape = 'u8[8192]{0}', space=vmem, size = 0x2000, scoped, tag = 'input window, operand 2, single buffered']
    #allocation7 [shape = 'u8[8192]{0}', space=vmem, size = 0x2000, scoped, tag = 'input window, operand 3, single buffered']
    #allocation8 [shape = 's32[1]{0}', space=sflag, size = 0x4, scoped, tag = 'scoped memory for _mlpa_loss.1']
    #allocation9 [shape = 'u8[2048]{0}', space=vmem, size = 0x800, scoped, tag = 'output window, operand 0']
    #allocation10 [shape = 'u8[16384]{0}', space=vmem, size = 0x4000, scoped, tag = 'output window, operand 1']
    %11 = vsyncpa [#allocation3], 0
    %s12 = scalar_lea.sflag [#allocation3], 1
    %13 = vsyncpa %s12, 0
    %14 = vsyncpa [#allocation5], 0
    %s15 = scalar_lea.sflag [#allocation5], 1
    %16 = vsyncpa %s15, 0
    %17 = vsyncpa [#allocation8], 0
    loop: start=0, step=1, limit=4
    $region2: #{_mlpa_loss.1} parent=1 // loop_pre_header
      _
    $region3: #{_mlpa_loss.1} parent=1 // loop_header
      %s19 = sphi 0, %s23
      %p20 = scmp.ge.s32.totalorder %s19, 4
      %s26 = sphi 0, %s38
      %s27 = sphi 0, %s34
      %s28 = sphi 0, %s26
      %s29 = sphi 0, %s27
      %s30 = sphi 0, %s28
      %s31 = sphi 0, %s29
      %s43 = sphi 0, %s45
      %s46 = sphi 0, %s43
      %s47 = sphi 0, %s46
      %s63 = sphi 0, %s47
      %s71 = sphi 0, %s73
      %s74 = sphi 0, %s71
      %s75 = sphi 0, %s74
      %s91 = sphi 0, %s75
      %s95 = sphi 0, %s95
      %s97 = sphi 0, %s95
      %s98 = sphi 0, %s97
      %s112 = sphi 0, %s98
      %s118 = sphi 0, %s120
      %s121 = sphi 0, %s118
      %s122 = sphi 0, %s121
      %s138 = sphi 0, %s122
      %s144 = sphi 0, %s146
      %s147 = sphi 0, %s144
      %s148 = sphi 0, %s147
      %s164 = sphi 0, %s148
      %s172 = sphi 0, %s174
      %s175 = sphi 0, %s172
      %s176 = sphi 0, %s175
      %s192 = sphi 0, %s176
    $region4: #{_mlpa_loss.1} parent=1 // loop_header_branch
      %22 = sbr.rel (%p20) target = $region8
    $region5: #{_mlpa_loss.1} parent=1 // loop_body
      %s24 = ssub.s32 %s19, 1
      %s25 = ssub.s32 %s19, 2
      %s32 = sadd.s32 1, %s27
      %p33 = scmp.ge.s32.totalorder %s32, 1
      %s34 = scalar_select %p33, 0, %s32
      %s35 = sadd.s32 1, %s26
      %s36 = scalar_select %p33, %s35, %s26
      %p37 = scmp.ge.s32.totalorder %s36, 2
      %s38 = scalar_select %p37, 0, %s36
      %s39 = ssub.s32 %s26, %s38
      %s40 = ssub.s32 %s27, %s34
      %s41 = sor.u32 %s39, %s40
      %p42 = scmp.eq.s32.totalorder %s41, 0
      %s44 = sadd.s32 %s43, 1
      %s45 = scalar_select %p42, %s43, %s44
      %p48 = pneg %p42
      %p49 = scmp.eq.s32.totalorder %s19, 1
      %p50 = por %p48, %p49
      %p51 = scmp.ne.s32.totalorder %s43, %s46
      %p52 = scmp.eq.s32.totalorder %s19, 0
      %p53 = por %p51, %p52
      %p54 = scmp.ne.s32.totalorder %s43, %s46
      %p55 = scmp.eq.s32.totalorder %s24, 1
      %p56 = por %p54, %p55
      %p57 = scmp.ne.s32.totalorder %s46, %s47
      %p58 = scmp.eq.s32.totalorder %s24, 0
      %p59 = por %p57, %p58
      %p60 = scmp.ne.s32.totalorder %s46, %s47
      %p61 = scmp.eq.s32.totalorder %s25, 1
      %p62 = por %p60, %p61
      %p64 = scmp.ne.s32.totalorder %s47, %s63
      %p65 = scmp.eq.s32.totalorder %s25, 0
      %p66 = por %p64, %p65
      %s67 = ssub.s32 %s26, %s38
      %s68 = ssub.s32 %s27, %s34
      %s69 = sor.u32 %s67, %s68
      %p70 = scmp.eq.s32.totalorder %s69, 0
      %s72 = sadd.s32 %s71, 1
      %s73 = scalar_select %p70, %s71, %s72
      %p76 = pneg %p70
      %p77 = scmp.eq.s32.totalorder %s19, 1
      %p78 = por %p76, %p77
      %p79 = scmp.ne.s32.totalorder %s71, %s74
      %p80 = scmp.eq.s32.totalorder %s19, 0
      %p81 = por %p79, %p80
      %p82 = scmp.ne.s32.totalorder %s71, %s74
      %p83 = scmp.eq.s32.totalorder %s24, 1
      %p84 = por %p82, %p83
      %p85 = scmp.ne.s32.totalorder %s74, %s75
      %p86 = scmp.eq.s32.totalorder %s24, 0
      %p87 = por %p85, %p86
      %p88 = scmp.ne.s32.totalorder %s74, %s75
      %p89 = scmp.eq.s32.totalorder %s25, 1
      %p90 = por %p88, %p89
      %p92 = scmp.ne.s32.totalorder %s75, %s91
      %p93 = scmp.eq.s32.totalorder %s25, 0
      %p94 = por %p92, %p93
      %s96 = sadd.s32 %s95, 1
      %p99 = scmp.eq.s32.totalorder %s19, 1
      %p100 = scmp.ne.s32.totalorder %s95, %s97
      %p101 = scmp.eq.s32.totalorder %s19, 0
      %p102 = por %p100, %p101
      %p103 = scmp.ne.s32.totalorder %s95, %s97
      %p104 = scmp.eq.s32.totalorder %s24, 1
      %p105 = por %p103, %p104
      %p106 = scmp.ne.s32.totalorder %s97, %s98
      %p107 = scmp.eq.s32.totalorder %s24, 0
      %p108 = por %p106, %p107
      %p109 = scmp.ne.s32.totalorder %s97, %s98
      %p110 = scmp.eq.s32.totalorder %s25, 1
      %p111 = por %p109, %p110
      %p113 = scmp.ne.s32.totalorder %s98, %s112
      %p114 = scmp.eq.s32.totalorder %s25, 0
      %p115 = por %p113, %p114
      %s116 = ssub.s32 %s27, %s34
      %p117 = scmp.eq.s32.totalorder %s116, 0
      %s119 = sadd.s32 %s118, 1
      %s120 = scalar_select %p117, %s118, %s119
      %p123 = pneg %p117
      %p124 = scmp.eq.s32.totalorder %s19, 1
      %p125 = por %p123, %p124
      %p126 = scmp.ne.s32.totalorder %s118, %s121
      %p127 = scmp.eq.s32.totalorder %s19, 0
      %p128 = por %p126, %p127
      %p129 = scmp.ne.s32.totalorder %s118, %s121
      %p130 = scmp.eq.s32.totalorder %s24, 1
      %p131 = por %p129, %p130
      %p132 = scmp.ne.s32.totalorder %s121, %s122
      %p133 = scmp.eq.s32.totalorder %s24, 0
      %p134 = por %p132, %p133
      %p135 = scmp.ne.s32.totalorder %s121, %s122
      %p136 = scmp.eq.s32.totalorder %s25, 1
      %p137 = por %p135, %p136
      %p139 = scmp.ne.s32.totalorder %s122, %s138
      %p140 = scmp.eq.s32.totalorder %s25, 0
      %p141 = por %p139, %p140
      %s142 = ssub.s32 %s26, %s38
      %p143 = scmp.eq.s32.totalorder %s142, 0
      %s145 = sadd.s32 %s144, 1
      %s146 = scalar_select %p143, %s144, %s145
      %p149 = pneg %p143
      %p150 = scmp.eq.s32.totalorder %s19, 1
      %p151 = por %p149, %p150
      %p152 = scmp.ne.s32.totalorder %s144, %s147
      %p153 = scmp.eq.s32.totalorder %s19, 0
      %p154 = por %p152, %p153
      %p155 = scmp.ne.s32.totalorder %s144, %s147
      %p156 = scmp.eq.s32.totalorder %s24, 1
      %p157 = por %p155, %p156
      %p158 = scmp.ne.s32.totalorder %s147, %s148
      %p159 = scmp.eq.s32.totalorder %s24, 0
      %p160 = por %p158, %p159
      %p161 = scmp.ne.s32.totalorder %s147, %s148
      %p162 = scmp.eq.s32.totalorder %s25, 1
      %p163 = por %p161, %p162
      %p165 = scmp.ne.s32.totalorder %s148, %s164
      %p166 = scmp.eq.s32.totalorder %s25, 0
      %p167 = por %p165, %p166
      %s168 = ssub.s32 %s26, %s38
      %s169 = ssub.s32 %s27, %s34
      %s170 = sor.u32 %s168, %s169
      %p171 = scmp.eq.s32.totalorder %s170, 0
      %s173 = sadd.s32 %s172, 1
      %s174 = scalar_select %p171, %s172, %s173
      %p177 = pneg %p171
      %p178 = scmp.eq.s32.totalorder %s19, 1
      %p179 = por %p177, %p178
      %p180 = scmp.ne.s32.totalorder %s172, %s175
      %p181 = scmp.eq.s32.totalorder %s19, 0
      %p182 = por %p180, %p181
      %p183 = scmp.ne.s32.totalorder %s172, %s175
      %p184 = scmp.eq.s32.totalorder %s24, 1
      %p185 = por %p183, %p184
      %p186 = scmp.ne.s32.totalorder %s175, %s176
      %p187 = scmp.eq.s32.totalorder %s24, 0
      %p188 = por %p186, %p187
      %p189 = scmp.ne.s32.totalorder %s175, %s176
      %p190 = scmp.eq.s32.totalorder %s25, 1
      %p191 = por %p189, %p190
      %p193 = scmp.ne.s32.totalorder %s176, %s192
      %p194 = scmp.eq.s32.totalorder %s25, 0
      %p195 = por %p193, %p194
      %p196 = scmp.le.s32.totalorder 1, %s19
      %p197 = scmp.lt.s32.totalorder %s19, 3
      %p198 = pnand %p196, %p197
      %p199 = pneg %p198
      // Predicated region
      $region9: #{_mlpa_loss.1} parent=5 // pred_check
        _
      $region10: #{_mlpa_loss.1} parent=5 // pred_check_branch
        %201 = sbr.rel (%p198) target = $region12
      $region11: #{_mlpa_loss.1} parent=5 // pred_region
        %s202 = ssub.s32 %s19, 1
        // Predicated region
        $region13: #{_mlpa_loss.1} parent=11 // pred_check
          %p203 = pneg %p108
        $region14: #{_mlpa_loss.1} parent=11 // pred_check_branch
          %205 = sbr.rel (%p203) target = $region16
        $region15: #{_mlpa_loss.1} parent=11 // pred_region
          %s207 = ssub.s32 256, 256
          %208 = vsyncadd [#allocation5], %s207
          %s209 = sshll.u32 [#allocation6], 4
          %s210 = int_to_ptr.vmem [resolvable:$true] %s209
          %215 = dma.hbm_to_vmem [thread:$0]  %s2, 256, %s210, [#allocation5], 128, 128, 8
        $region16: #{_mlpa_loss.1} parent=11 // pred_fallthru
          _
        // Predicated region
        $region17: #{_mlpa_loss.1} parent=11 // pred_check
          %p216 = pneg %p134
        $region18: #{_mlpa_loss.1} parent=11 // pred_check_branch
          %218 = sbr.rel (%p216) target = $region20
        $region19: #{_mlpa_loss.1} parent=11 // pred_region
          %s219 = smul.u32 2, %s29
          %s221 = ssub.s32 256, 256
          %222 = vsyncadd [#allocation8], %s221
          %s223 = smul.addr %s219, 128
          %s224 = scalar_lea.hbm %s3, %s223
          %s225 = sshll.u32 [#allocation7], 4
          %s226 = int_to_ptr.vmem [resolvable:$true] %s225
          %231 = dma.hbm_to_vmem [thread:$0]  %s224, 256, %s226, [#allocation8], 128, 128, 8
        $region20: #{_mlpa_loss.1} parent=11 // pred_fallthru
          _
      $region12: #{_mlpa_loss.1} parent=5 // pred_fallthru
        _
      %p232 = scmp.lt.s32.totalorder %s19, 2
      // Predicated region
      $region21: #{_mlpa_loss.1} parent=5 // pred_check
        %p233 = pneg %p232
      $region22: #{_mlpa_loss.1} parent=5 // pred_check_branch
        %235 = sbr.rel (%p233) target = $region24
      $region23: #{_mlpa_loss.1} parent=5 // pred_region
        // Predicated region
        $region25: #{_mlpa_loss.1} parent=23 // pred_check
          %p236 = pneg %p53
        $region26: #{_mlpa_loss.1} parent=23 // pred_check_branch
          %238 = sbr.rel (%p236) target = $region28
        $region27: #{_mlpa_loss.1} parent=23 // pred_region
          %s239 = sand.u32 %s43, 1
          %s240 = scalar_lea.sflag [#allocation3], %s239
          %s241 = sand.u32 %s43, 1
          %s242 = smul.addr %s241, 48
          %s243 = scalar_lea.vmem [#allocation2], %s242
          %s244 = smul.u32 2, %s27
          %s246 = ssub.s32 768, 768
          %247 = vsyncadd %s240, %s246
          %s248 = smul.addr %s26, 6
          %s249 = sadd.s32 %s244, %s248
          %s250 = smul.addr %s249, 128
          %s251 = scalar_lea.hbm %s0, %s250
          %s252 = sshll.u32 %s243, 4
          %s253 = int_to_ptr.vmem [resolvable:$true] %s252
          %258 = dma.hbm_to_vmem [thread:$0]  %s251, 768, %s253, %s240, 128, 128, 8
        $region28: #{_mlpa_loss.1} parent=23 // pred_fallthru
          _
        // Predicated region
        $region29: #{_mlpa_loss.1} parent=23 // pred_check
          %p259 = pneg %p81
        $region30: #{_mlpa_loss.1} parent=23 // pred_check_branch
          %261 = sbr.rel (%p259) target = $region32
        $region31: #{_mlpa_loss.1} parent=23 // pred_region
          %s262 = sand.u32 %s19, 1
          %s263 = scalar_lea.sflag [#allocation5], %s262
          %s264 = sand.u32 %s71, 1
          %s265 = smul.addr %s264, 48
          %s266 = scalar_lea.vmem [#allocation4], %s265
          %s267 = smul.u32 2, %s27
          %s269 = ssub.s32 768, 768
          %270 = vsyncadd %s263, %s269
          %s271 = smul.addr %s26, 6
          %s272 = sadd.s32 %s267, %s271
          %s273 = smul.addr %s272, 128
          %s274 = scalar_lea.hbm %s1, %s273
          %s275 = sshll.u32 %s266, 4
          %s276 = int_to_ptr.vmem [resolvable:$true] %s275
          %281 = dma.hbm_to_vmem [thread:$0]  %s274, 768, %s276, %s263, 128, 128, 8
        $region32: #{_mlpa_loss.1} parent=23 // pred_fallthru
          _
      $region24: #{_mlpa_loss.1} parent=5 // pred_fallthru
        _
      %p282 = scmp.le.s32.totalorder 1, %s19
      %p283 = scmp.lt.s32.totalorder %s19, 3
      %p284 = pnand %p282, %p283
      %p285 = pneg %p284
      // Predicated region
      $region33: #{_mlpa_loss.1} parent=5 // pred_check
        _
      $region34: #{_mlpa_loss.1} parent=5 // pred_check_branch
        %287 = sbr.rel (%p284) target = $region36
      $region35: #{_mlpa_loss.1} parent=5 // pred_region
        %s288 = ssub.s32 %s19, 1
        %s289 = sand.u32 %s46, 1
        %s290 = scalar_lea.sflag [#allocation3], %s289
        %s291 = sand.u32 %s46, 1
        %s292 = smul.addr %s291, 48
        %s293 = scalar_lea.vmem [#allocation2], %s292
        // Predicated region
        $region37: #{_mlpa_loss.1} parent=35 // pred_check
          %p294 = pneg %p59
        $region38: #{_mlpa_loss.1} parent=35 // pred_check_branch
          %296 = sbr.rel (%p294) target = $region40
        $region39: #{_mlpa_loss.1} parent=35 // pred_region
          %297 = dma.done %s290, 768
        $region40: #{_mlpa_loss.1} parent=35 // pred_fallthru
          _
        %s298 = sand.u32 %s24, 1
        %s299 = scalar_lea.sflag [#allocation5], %s298
        %s300 = sand.u32 %s74, 1
        %s301 = smul.addr %s300, 48
        %s302 = scalar_lea.vmem [#allocation4], %s301
        // Predicated region
        $region41: #{_mlpa_loss.1} parent=35 // pred_check
          %p303 = pneg %p87
        $region42: #{_mlpa_loss.1} parent=35 // pred_check_branch
          %305 = sbr.rel (%p303) target = $region44
        $region43: #{_mlpa_loss.1} parent=35 // pred_region
          %306 = dma.done %s299, 768
        $region44: #{_mlpa_loss.1} parent=35 // pred_fallthru
          _
        // Predicated region
        $region45: #{_mlpa_loss.1} parent=35 // pred_check
          %p307 = pneg %p108
        $region46: #{_mlpa_loss.1} parent=35 // pred_check_branch
          %309 = sbr.rel (%p307) target = $region48
        $region47: #{_mlpa_loss.1} parent=35 // pred_region
          %310 = dma.done [#allocation5], 256
        $region48: #{_mlpa_loss.1} parent=35 // pred_fallthru
          _
        // Predicated region
        $region49: #{_mlpa_loss.1} parent=35 // pred_check
          %p311 = pneg %p134
        $region50: #{_mlpa_loss.1} parent=35 // pred_check_branch
          %313 = sbr.rel (%p311) target = $region52
        $region51: #{_mlpa_loss.1} parent=35 // pred_region
          %314 = dma.done [#allocation8], 256
        $region52: #{_mlpa_loss.1} parent=35 // pred_fallthru
          _
        %s315 = sand.u32 %s46, 1
        %s316 = scalar_lea.sflag [#allocation3], %s315
        %s317 = sand.u32 %s46, 1
        %s318 = smul.addr %s317, 48
        %s319 = scalar_lea.vmem [#allocation2], %s318
        %p320 = pneg %p59
        %p321 = pneg %p56
        %s322 = sand.u32 %s24, 1
        %s323 = scalar_lea.sflag [#allocation5], %s322
        %s324 = sand.u32 %s74, 1
        %s325 = smul.addr %s324, 48
        %s326 = scalar_lea.vmem [#allocation4], %s325
        %p327 = pneg %p87
        %p328 = pneg %p84
        %p329 = pneg %p108
        %p330 = pneg %p105
        %p331 = pneg %p134
        %p332 = pneg %p131
        %p333 = pneg %p160
        %p334 = pneg %p157
        %s335 = sand.u32 %s147, 1
        %s336 = sand.u32 %s147, 1
        %s337 = smul.addr %s336, 2
        %s338 = scalar_lea.vmem [#allocation9], %s337
        %p339 = pneg %p188
        %p340 = pneg %p185
        %s341 = sand.u32 %s175, 1
        %s342 = sand.u32 %s175, 1
        %s343 = smul.addr %s342, 16
        %s344 = scalar_lea.vmem [#allocation10], %s343
        %s345 = smul.u32 2, %s29
        %s346 = smul.u32 2, %s29
        %s347 = smul.u32 2, %s29
        %s348 = smul.u32 2, %s29
        %p349 = scmp.eq.s32.totalorder %s29, 0
        // Predicated region
        $region53: #{_mlpa_loss.1} parent=35 // pred_check
          %p350 = pneg %p349
        $region54: #{_mlpa_loss.1} parent=35 // pred_check_branch
          %352 = sbr.rel (%p350) target = $region56
        $region55: #{_mlpa_loss.1} parent=35 // pred_region
          %353 = vst [vmem:[%s338] sm:$0x1] 0.0
          %354 = vst [vmem:[%s338 + $0x1] sm:$0x1] 0.0
        $region56: #{_mlpa_loss.1} parent=35 // pred_fallthru
          _
        %v355 = vld [vmem:[#allocation6] sm:$0xff]
        %v356 = vld [vmem:[#allocation6 + $0x8] sm:$0xff]
        %v357 = vld [vmem:[#allocation7] sm:$0xff]
        %v358 = vld [vmem:[#allocation7 + $0x8] sm:$0xff]
        %v359 = vlaneseq
        %v360 = vand.u32 %v359, 127
        %v361 = vld [vmem:[%s293] sm:$0xff]
        %v362 = vld [vmem:[%s293 + $0x8] sm:$0xff]
        %v363 = vld [vmem:[%s293 + $0x10] sm:$0xff]
        %v364 = vld [vmem:[%s293 + $0x18] sm:$0xff]
        %v365 = vld [vmem:[%s293 + $0x20] sm:$0xff]
        %v366 = vld [vmem:[%s293 + $0x28] sm:$0xff]
        %v367 = vmax.f32 %v361, 1e-06
        %v368 = vmax.f32 %v362, 1e-06
        %v369 = vlog2.pop %v367
        %v370 = vmul.f32 %v369, 0.6931472
        %v371 = vlog2.pop %v368
        %v372 = vmul.f32 %v371, 0.6931472
        %v373 = vmul.f32 %v370, -0.07238241
        %v374 = vmul.f32 %v372, -0.07238241
        %v375 = vmax.f32 %v363, 1e-06
        %v376 = vmax.f32 %v364, 1e-06
        %v377 = vlog2.pop %v375
        %v378 = vmul.f32 %v377, 0.6931472
        %v379 = vlog2.pop %v376
        %v380 = vmul.f32 %v379, 0.6931472
        %v381 = vmul.f32 %v378, -0.07238241
        %v382 = vmul.f32 %v380, -0.07238241
        %v383 = vmax.f32 %v365, 1e-06
        %v384 = vmax.f32 %v366, 1e-06
        %v385 = vlog2.pop %v383
        %v386 = vmul.f32 %v385, 0.6931472
        %v387 = vlog2.pop %v384
        %v388 = vmul.f32 %v387, 0.6931472
        %v389 = vmul.f32 %v386, -0.07238241
        %v390 = vmul.f32 %v388, -0.07238241
        %v391 = vmul.f32 %v373, -0.55611587
        %v392 = vmul.f32 %v374, -0.55611587
        %v393 = vmul.f32 %v381, -0.1355218
        %v394 = vmul.f32 %v382, -0.1355218
        %v395 = vadd.f32 %v391, %v393
        %v396 = vadd.f32 %v392, %v394
        %v397 = vmul.f32 %v389, 1.5735881
        %v398 = vmul.f32 %v390, 1.5735881
        %v399 = vadd.f32 %v395, %v397
        %v400 = vadd.f32 %v396, %v398
        %v401 = vmax.f32 %v399, 0.0
        %v402 = vmax.f32 %v400, 0.0
        %v403 = vmul.f32 %v401, -3.730188
        %v404 = vmul.f32 %v402, -3.730188
        %v405 = vmul.f32 %v403, 1.442695
        %v406 = vpow.pop %v405
        %v407 = vmul.f32 %v404, 1.442695
        %v408 = vpow.pop %v407
        %v409 = vmul.f32 %v406, 0.2125
        %v410 = vmul.f32 %v408, 0.2125
        %v411 = vmul.f32 %v401, -7.8748407
        %v412 = vmul.f32 %v402, -7.8748407
        %v413 = vmul.f32 %v411, 1.442695
        %v414 = vpow.pop %v413
        %v415 = vmul.f32 %v412, 1.442695
        %v416 = vpow.pop %v415
        %v417 = vmul.f32 %v414, 0.7154
        %v418 = vmul.f32 %v416, 0.7154
        %v419 = vadd.f32 %v409, %v417
        %v420 = vadd.f32 %v410, %v418
        %v421 = vmul.f32 %v401, -10.776098
        %v422 = vmul.f32 %v402, -10.776098
        %v423 = vmul.f32 %v421, 1.442695
        %v424 = vpow.pop %v423
        %v425 = vmul.f32 %v422, 1.442695
        %v426 = vpow.pop %v425
        %v427 = vmul.f32 %v424, 0.0721
        %v428 = vmul.f32 %v426, 0.0721
        %v429 = vadd.f32 %v419, %v427
        %v430 = vadd.f32 %v420, %v428
        %v431 = vadd.f32 %v429, 0.018075528
        %v432 = vadd.f32 %v430, 0.018075528
        %v433 = vlog2.pop %v431
        %v434 = vmul.f32 %v433, 0.6931472
        %v435 = vlog2.pop %v432
        %v436 = vmul.f32 %v435, 0.6931472
        %v437 = vmul.f32 %v434, -0.4342945
        %v438 = vmul.f32 %v436, -0.4342945
        %v439 = vmax.f32 %v437, 0.0
        %v440 = vmax.f32 %v438, 0.0
        %vm441 = vcmp.gt.f32.partialorder %v439, 0.0
        %vm442 = vcmp.gt.f32.partialorder %v440, 0.0
        %v443 = vmax.f32 %v439, 1e-30
        %v444 = vmax.f32 %v440, 1e-30
        %v445 = vlog2.pop %v443
        %v446 = vmul.f32 %v445, 0.6931472
        %v447 = vlog2.pop %v444
        %v448 = vmul.f32 %v447, 0.6931472
        %v449 = vmul.f32 %v446, 1.8
        %v450 = vmul.f32 %v448, 1.8
        %v451 = vmul.f32 %v449, 1.442695
        %v452 = vpow.pop %v451
        %v453 = vmul.f32 %v450, 1.442695
        %v454 = vpow.pop %v453
        %v455 = vsel %vm441, %v452, 0.0
        %v456 = vsel %vm442, %v454, 0.0
        %vm457 = vcmp.lt.f32.partialorder %v455, 0.15
        %vm458 = vcmp.lt.f32.partialorder %v456, 0.15
        %v459 = vsel %vm457, 0.0, %v455
        %v460 = vsel %vm458, 0.0, %v456
        %vm461 = vcmp.ge.f32.partialorder %v455, 0.68
        %vm462 = vcmp.ge.f32.partialorder %v456, 0.68
        %v463 = vsel %vm461, 1, 0
        %v464 = vsel %vm462, 1, 0
        %v465 = vcvt.s32.f32 %v463
        %v466 = vcvt.s32.f32 %v464
        %v467 = vpack.c.bf16 %v466, %v465
        %v469 = vunpack.c.l.b16 %v467
        %v470 = vunpack.c.h.b16 %v467
        %v471 = vpack.c.b16 %v469, %v469
        %v472 = vpack.c.b16 %v470, %v470
        %vm475 = vcmask 125952
        %476 = vst.msk [vmem:[%s344] sm:$0xf] %vm475, %v471
        %477 = vst.msk [vmem:[%s344 + $0x4] sm:$0xf] %vm475, %v472
        %vm478 = vcmask 130048
        %v480 = vsel %vm478, %v459, 0
        %v483 = vsel %vm478, %v460, 0
        %485 = vmatprep.subr.mxu0 0.0
        %486 = vmatpush1.msra.mxu0 0.0
        %487 = vmatprep.subr.mxu0 0.0
        %488 = vmatpush1.msra.mxu0 0.0
        %489 = vmatprep.subr.mxu0 0.0
        %490 = vmatpush1.msra.mxu0 0.0
        %491 = vmatprep.subr.mxu0 0.0
        %492 = vmatpush1.msra.mxu0 0.0
        %493 = vmatprep.subr.mxu0 0.0
        %494 = vmatpush1.msra.mxu0 0.0
        %495 = vmatprep.subr.mxu0 0.0
        %496 = vmatpush1.msra.mxu0 0.0
        %497 = vmatprep.subr.mxu0 0.0
        %498 = vmatpush1.msra.mxu0 0.0
        %499 = vmatprep.subr.mxu0 0.0
        %500 = vmatpush1.msra.mxu0 0.0
        %501 = vmatprep.subr.mxu0 0.0
        %502 = vmatpush1.msra.mxu0 0.0
        %503 = vmatprep.subr.mxu0 0.0
        %504 = vmatpush1.msra.mxu0 0.0
        %505 = vmatprep.subr.mxu0 0.0
        %506 = vmatpush1.msra.mxu0 0.0
        %507 = vmatprep.subr.mxu0 0.0
        %508 = vmatpush1.msra.mxu0 0.0
        %509 = vmatprep.subr.mxu0 0.0
        %510 = vmatpush1.msra.mxu0 0.0
        %511 = vmatprep.subr.mxu0 0.0
        %512 = vmatpush1.msra.mxu0 0.0
        %513 = vmatprep.subr.mxu0 0.0
        %514 = vmatpush1.msra.mxu0 %v356
        %515 = vmatprep.subr.mxu0 0.0
        %516 = vmatpush1.msra.mxu0 %v355
        %517 = vmatprep.subr.mxu0 0.0
        %518 = vmatpush2.msra.mxu0 0.0
        %519 = vmatprep.subr.mxu0 0.0
        %520 = vmatpush2.msra.mxu0 0.0
        %521 = vmatprep.subr.mxu0 0.0
        %522 = vmatpush2.msra.mxu0 0.0
        %523 = vmatprep.subr.mxu0 0.0
        %524 = vmatpush2.msra.mxu0 0.0
        %525 = vmatprep.subr.mxu0 0.0
        %526 = vmatpush2.msra.mxu0 0.0
        %527 = vmatprep.subr.mxu0 0.0
        %528 = vmatpush2.msra.mxu0 0.0
        %529 = vmatprep.subr.mxu0 0.0
        %530 = vmatpush2.msra.mxu0 0.0
        %531 = vmatprep.subr.mxu0 0.0
        %532 = vmatpush2.msra.mxu0 0.0
        %533 = vmatprep.subr.mxu0 0.0
        %534 = vmatpush2.msra.mxu0 0.0
        %535 = vmatprep.subr.mxu0 0.0
        %536 = vmatpush2.msra.mxu0 0.0
        %537 = vmatprep.subr.mxu0 0.0
        %538 = vmatpush2.msra.mxu0 0.0
        %539 = vmatprep.subr.mxu0 0.0
        %540 = vmatpush2.msra.mxu0 0.0
        %541 = vmatprep.subr.mxu0 0.0
        %542 = vmatpush2.msra.mxu0 0.0
        %543 = vmatprep.subr.mxu0 0.0
        %544 = vmatpush2.msra.mxu0 0.0
        %545 = vmatprep.subr.mxu0 0.0
        %546 = vmatpush2.msra.mxu0 0.0
        %547 = vmatprep.subr.mxu0 0.0
        %548 = vmatpush2.msra.mxu0 0.0
        %549 = vmatprep.mubr.f32.mxu0 0.0
        %550 = vmatmul.mubr.f32.gmra.mxu0 %v480
        %v551 = vpop.f32.mrf.mxu0
        %v552 = vadd.f32 0.0, %v551
        %v553 = vpop.f32.mrf.mxu0
        %554 = vmatprep.mubr.f32.mxu0 0.0
        %555 = vmatmul.mubr.f32.gmra.mxu0 %v483
        %v556 = vpop.f32.mrf.mxu0
        %v557 = vadd.f32 0.0, %v556
        %v558 = vpop.f32.mrf.mxu0
        %559 = vdwg.mxu0
        %v560 = vmul.f32 %v552, %v357
        %v561 = vmul.f32 %v557, %v358
        %v562 = vadd.f32 %v560, %v561
        %v563 = vrot.slane %v562, 4
        %v564 = vadd.f32 %v562, %v563
        %v565 = vrot.slane %v564, 2
        %v566 = vadd.f32 %v564, %v565
        %v567 = vrot.slane %v566, 1
        %v568 = vadd.f32 %v566, %v567
        %v569 = vsel %vm478, %v455, 0.0
        %v570 = vsel %vm478, %v456, 0.0
        %v571 = vadd.f32 %v569, %v570
        %572 = vadd.xlane.f32.xlu0 %v571
        %v573 = vpop.xlane.xlu0 %572
        %v574 = vrot.slane %v573, 4
        %v575 = vadd.f32 %v573, %v574
        %v576 = vrot.slane %v575, 2
        %v577 = vadd.f32 %v575, %v576
        %v578 = vrot.slane %v577, 1
        %v579 = vadd.f32 %v577, %v578
        %s580 = vtos %v579
        %vm581 = vcmp.ge.f32.partialorder %v455, 0.13591409
        %vm582 = vcmp.ge.f32.partialorder %v456, 0.13591409
        %v583 = vsel %vm581, %v455, 0.0
        %v584 = vsel %vm582, %v456, 0.0
        %v585 = vsel %vm478, %v583, 0.0
        %v586 = vsel %vm478, %v584, 0.0
        %v587 = vadd.f32 %v585, %v586
        %588 = vadd.xlane.f32.xlu0 %v587
        %v589 = vpop.xlane.xlu0 %588
        %v590 = vrot.slane %v589, 4
        %v591 = vadd.f32 %v589, %v590
        %v592 = vrot.slane %v591, 2
        %v593 = vadd.f32 %v591, %v592
        %v594 = vrot.slane %v593, 1
        %v595 = vadd.f32 %v593, %v594
        %s596 = vtos %v595
        %vm597 = vcmp.ge.f32.partialorder %v455, 0.27182817
        %vm598 = vcmp.ge.f32.partialorder %v456, 0.27182817
        %v599 = vsel %vm597, %v455, 0.0
        %v600 = vsel %vm598, %v456, 0.0
        %v601 = vsel %vm478, %v599, 0.0
        %v602 = vsel %vm478, %v600, 0.0
        %v603 = vadd.f32 %v601, %v602
        %604 = vadd.xlane.f32.xlu0 %v603
        %v605 = vpop.xlane.xlu0 %604
        %v606 = vrot.slane %v605, 4
        %v607 = vadd.f32 %v605, %v606
        %v608 = vrot.slane %v607, 2
        %v609 = vadd.f32 %v607, %v608
        %v610 = vrot.slane %v609, 1
        %v611 = vadd.f32 %v609, %v610
        %s612 = vtos %v611
        %vm613 = vcmp.ge.f32.partialorder %v455, 0.40774226
        %vm614 = vcmp.ge.f32.partialorder %v456, 0.40774226
        %v615 = vsel %vm613, %v455, 0.0
        %v616 = vsel %vm614, %v456, 0.0
        %v617 = vsel %vm478, %v615, 0.0
        %v618 = vsel %vm478, %v616, 0.0
        %v619 = vadd.f32 %v617, %v618
        %620 = vadd.xlane.f32.xlu0 %v619
        %v621 = vpop.xlane.xlu0 %620
        %v622 = vrot.slane %v621, 4
        %v623 = vadd.f32 %v621, %v622
        %v624 = vrot.slane %v623, 2
        %v625 = vadd.f32 %v623, %v624
        %v626 = vrot.slane %v625, 1
        %v627 = vadd.f32 %v625, %v626
        %s628 = vtos %v627
        %vm629 = vcmp.ge.f32.partialorder %v455, 0.54365635
        %vm630 = vcmp.ge.f32.partialorder %v456, 0.54365635
        %v631 = vsel %vm629, %v455, 0.0
        %v632 = vsel %vm630, %v456, 0.0
        %v633 = vsel %vm478, %v631, 0.0
        %v634 = vsel %vm478, %v632, 0.0
        %v635 = vadd.f32 %v633, %v634
        %636 = vadd.xlane.f32.xlu0 %v635
        %v637 = vpop.xlane.xlu0 %636
        %v638 = vrot.slane %v637, 4
        %v639 = vadd.f32 %v637, %v638
        %v640 = vrot.slane %v639, 2
        %v641 = vadd.f32 %v639, %v640
        %v642 = vrot.slane %v641, 1
        %v643 = vadd.f32 %v641, %v642
        %s644 = vtos %v643
        %vm645 = vcmp.ge.f32.partialorder %v455, 0.67957044
        %vm646 = vcmp.ge.f32.partialorder %v456, 0.67957044
        %v647 = vsel %vm645, %v455, 0.0
        %v648 = vsel %vm646, %v456, 0.0
        %v649 = vsel %vm478, %v647, 0.0
        %v650 = vsel %vm478, %v648, 0.0
        %v651 = vadd.f32 %v649, %v650
        %652 = vadd.xlane.f32.xlu0 %v651
        %v653 = vpop.xlane.xlu0 %652
        %v654 = vrot.slane %v653, 4
        %v655 = vadd.f32 %v653, %v654
        %v656 = vrot.slane %v655, 2
        %v657 = vadd.f32 %v655, %v656
        %v658 = vrot.slane %v657, 1
        %v659 = vadd.f32 %v657, %v658
        %s660 = vtos %v659
        %vm661 = vcmp.ge.f32.partialorder %v455, 0.8154845
        %vm662 = vcmp.ge.f32.partialorder %v456, 0.8154845
        %v663 = vsel %vm661, %v455, 0.0
        %v664 = vsel %vm662, %v456, 0.0
        %v665 = vsel %vm478, %v663, 0.0
        %v666 = vsel %vm478, %v664, 0.0
        %v667 = vadd.f32 %v665, %v666
        %668 = vadd.xlane.f32.xlu0 %v667
        %v669 = vpop.xlane.xlu0 %668
        %v670 = vrot.slane %v669, 4
        %v671 = vadd.f32 %v669, %v670
        %v672 = vrot.slane %v671, 2
        %v673 = vadd.f32 %v671, %v672
        %v674 = vrot.slane %v673, 1
        %v675 = vadd.f32 %v673, %v674
        %s676 = vtos %v675
        %vm677 = vcmp.ge.f32.partialorder %v455, 0.9513986
        %vm678 = vcmp.ge.f32.partialorder %v456, 0.9513986
        %v679 = vsel %vm677, %v455, 0.0
        %v680 = vsel %vm678, %v456, 0.0
        %v681 = vsel %vm478, %v679, 0.0
        %v682 = vsel %vm478, %v680, 0.0
        %v683 = vadd.f32 %v681, %v682
        %684 = vadd.xlane.f32.xlu0 %v683
        %v685 = vpop.xlane.xlu0 %684
        %v686 = vrot.slane %v685, 4
        %v687 = vadd.f32 %v685, %v686
        %v688 = vrot.slane %v687, 2
        %v689 = vadd.f32 %v687, %v688
        %v690 = vrot.slane %v689, 1
        %v691 = vadd.f32 %v689, %v690
        %s692 = vtos %v691
        %vm693 = vcmp.ge.f32.partialorder %v455, 1.0873127
        %vm694 = vcmp.ge.f32.partialorder %v456, 1.0873127
        %v695 = vsel %vm693, %v455, 0.0
        %v696 = vsel %vm694, %v456, 0.0
        %v697 = vsel %vm478, %v695, 0.0
        %v698 = vsel %vm478, %v696, 0.0
        %v699 = vadd.f32 %v697, %v698
        %700 = vadd.xlane.f32.xlu0 %v699
        %v701 = vpop.xlane.xlu0 %700
        %v702 = vrot.slane %v701, 4
        %v703 = vadd.f32 %v701, %v702
        %v704 = vrot.slane %v703, 2
        %v705 = vadd.f32 %v703, %v704
        %v706 = vrot.slane %v705, 1
        %v707 = vadd.f32 %v705, %v706
        %s708 = vtos %v707
        %vm709 = vcmp.ge.f32.partialorder %v455, 1.2232268
        %vm710 = vcmp.ge.f32.partialorder %v456, 1.2232268
        %v711 = vsel %vm709, %v455, 0.0
        %v712 = vsel %vm710, %v456, 0.0
        %v713 = vsel %vm478, %v711, 0.0
        %v714 = vsel %vm478, %v712, 0.0
        %v715 = vadd.f32 %v713, %v714
        %716 = vadd.xlane.f32.xlu0 %v715
        %v717 = vpop.xlane.xlu0 %716
        %v718 = vrot.slane %v717, 4
        %v719 = vadd.f32 %v717, %v718
        %v720 = vrot.slane %v719, 2
        %v721 = vadd.f32 %v719, %v720
        %v722 = vrot.slane %v721, 1
        %v723 = vadd.f32 %v721, %v722
        %s724 = vtos %v723
        %vm725 = vcmp.ge.f32.partialorder %v455, 1.3591409
        %vm726 = vcmp.ge.f32.partialorder %v456, 1.3591409
        %v727 = vsel %vm725, %v455, 0.0
        %v728 = vsel %vm726, %v456, 0.0
        %v729 = vsel %vm478, %v727, 0.0
        %v730 = vsel %vm478, %v728, 0.0
        %v731 = vadd.f32 %v729, %v730
        %732 = vadd.xlane.f32.xlu0 %v731
        %v733 = vpop.xlane.xlu0 %732
        %v734 = vrot.slane %v733, 4
        %v735 = vadd.f32 %v733, %v734
        %v736 = vrot.slane %v735, 2
        %v737 = vadd.f32 %v735, %v736
        %v738 = vrot.slane %v737, 1
        %v739 = vadd.f32 %v737, %v738
        %s740 = vtos %v739
        %vm741 = vcmp.ge.f32.partialorder %v455, 1.495055
        %vm742 = vcmp.ge.f32.partialorder %v456, 1.495055
        %v743 = vsel %vm741, %v455, 0.0
        %v744 = vsel %vm742, %v456, 0.0
        %v745 = vsel %vm478, %v743, 0.0
        %v746 = vsel %vm478, %v744, 0.0
        %v747 = vadd.f32 %v745, %v746
        %748 = vadd.xlane.f32.xlu0 %v747
        %v749 = vpop.xlane.xlu0 %748
        %v750 = vrot.slane %v749, 4
        %v751 = vadd.f32 %v749, %v750
        %v752 = vrot.slane %v751, 2
        %v753 = vadd.f32 %v751, %v752
        %v754 = vrot.slane %v753, 1
        %v755 = vadd.f32 %v753, %v754
        %s756 = vtos %v755
        %vm757 = vcmp.ge.f32.partialorder %v455, 1.630969
        %vm758 = vcmp.ge.f32.partialorder %v456, 1.630969
        %v759 = vsel %vm757, %v455, 0.0
        %v760 = vsel %vm758, %v456, 0.0
        %v761 = vsel %vm478, %v759, 0.0
        %v762 = vsel %vm478, %v760, 0.0
        %v763 = vadd.f32 %v761, %v762
        %764 = vadd.xlane.f32.xlu0 %v763
        %v765 = vpop.xlane.xlu0 %764
        %v766 = vrot.slane %v765, 4
        %v767 = vadd.f32 %v765, %v766
        %v768 = vrot.slane %v767, 2
        %v769 = vadd.f32 %v767, %v768
        %v770 = vrot.slane %v769, 1
        %v771 = vadd.f32 %v769, %v770
        %s772 = vtos %v771
        %vm773 = vcmp.ge.f32.partialorder %v455, 1.7668831
        %vm774 = vcmp.ge.f32.partialorder %v456, 1.7668831
        %v775 = vsel %vm773, %v455, 0.0
        %v776 = vsel %vm774, %v456, 0.0
        %v777 = vsel %vm478, %v775, 0.0
        %v778 = vsel %vm478, %v776, 0.0
        %v779 = vadd.f32 %v777, %v778
        %780 = vadd.xlane.f32.xlu0 %v779
        %v781 = vpop.xlane.xlu0 %780
        %v782 = vrot.slane %v781, 4
        %v783 = vadd.f32 %v781, %v782
        %v784 = vrot.slane %v783, 2
        %v785 = vadd.f32 %v783, %v784
        %v786 = vrot.slane %v785, 1
        %v787 = vadd.f32 %v785, %v786
        %s788 = vtos %v787
        %vm789 = vcmp.ge.f32.partialorder %v455, 1.9027972
        %vm790 = vcmp.ge.f32.partialorder %v456, 1.9027972
        %v791 = vsel %vm789, %v455, 0.0
        %v792 = vsel %vm790, %v456, 0.0
        %v793 = vsel %vm478, %v791, 0.0
        %v794 = vsel %vm478, %v792, 0.0
        %v795 = vadd.f32 %v793, %v794
        %796 = vadd.xlane.f32.xlu0 %v795
        %v797 = vpop.xlane.xlu0 %796
        %v798 = vrot.slane %v797, 4
        %v799 = vadd.f32 %v797, %v798
        %v800 = vrot.slane %v799, 2
        %v801 = vadd.f32 %v799, %v800
        %v802 = vrot.slane %v801, 1
        %v803 = vadd.f32 %v801, %v802
        %s804 = vtos %v803
        %vm805 = vcmp.ge.f32.partialorder %v455, 2.0387113
        %vm806 = vcmp.ge.f32.partialorder %v456, 2.0387113
        %v807 = vsel %vm805, %v455, 0.0
        %v808 = vsel %vm806, %v456, 0.0
        %v809 = vsel %vm478, %v807, 0.0
        %v810 = vsel %vm478, %v808, 0.0
        %v811 = vadd.f32 %v809, %v810
        %812 = vadd.xlane.f32.xlu0 %v811
        %v813 = vpop.xlane.xlu0 %812
        %v814 = vrot.slane %v813, 4
        %v815 = vadd.f32 %v813, %v814
        %v816 = vrot.slane %v815, 2
        %v817 = vadd.f32 %v815, %v816
        %v818 = vrot.slane %v817, 1
        %v819 = vadd.f32 %v817, %v818
        %s820 = vtos %v819
        %vm821 = vcmp.ge.f32.partialorder %v455, 2.1746254
        %vm822 = vcmp.ge.f32.partialorder %v456, 2.1746254
        %v823 = vsel %vm821, %v455, 0.0
        %v824 = vsel %vm822, %v456, 0.0
        %v825 = vsel %vm478, %v823, 0.0
        %v826 = vsel %vm478, %v824, 0.0
        %v827 = vadd.f32 %v825, %v826
        %828 = vadd.xlane.f32.xlu0 %v827
        %v829 = vpop.xlane.xlu0 %828
        %v830 = vrot.slane %v829, 4
        %v831 = vadd.f32 %v829, %v830
        %v832 = vrot.slane %v831, 2
        %v833 = vadd.f32 %v831, %v832
        %v834 = vrot.slane %v833, 1
        %v835 = vadd.f32 %v833, %v834
        %s836 = vtos %v835
        %vm837 = vcmp.ge.f32.partialorder %v455, 2.3105395
        %vm838 = vcmp.ge.f32.partialorder %v456, 2.3105395
        %v839 = vsel %vm837, %v455, 0.0
        %v840 = vsel %vm838, %v456, 0.0
        %v841 = vsel %vm478, %v839, 0.0
        %v842 = vsel %vm478, %v840, 0.0
        %v843 = vadd.f32 %v841, %v842
        %844 = vadd.xlane.f32.xlu0 %v843
        %v845 = vpop.xlane.xlu0 %844
        %v846 = vrot.slane %v845, 4
        %v847 = vadd.f32 %v845, %v846
        %v848 = vrot.slane %v847, 2
        %v849 = vadd.f32 %v847, %v848
        %v850 = vrot.slane %v849, 1
        %v851 = vadd.f32 %v849, %v850
        %s852 = vtos %v851
        %vm853 = vcmp.ge.f32.partialorder %v455, 2.4464536
        %vm854 = vcmp.ge.f32.partialorder %v456, 2.4464536
        %v855 = vsel %vm853, %v455, 0.0
        %v856 = vsel %vm854, %v456, 0.0
        %v857 = vsel %vm478, %v855, 0.0
        %v858 = vsel %vm478, %v856, 0.0
        %v859 = vadd.f32 %v857, %v858
        %860 = vadd.xlane.f32.xlu0 %v859
        %v861 = vpop.xlane.xlu0 %860
        %v862 = vrot.slane %v861, 4
        %v863 = vadd.f32 %v861, %v862
        %v864 = vrot.slane %v863, 2
        %v865 = vadd.f32 %v863, %v864
        %v866 = vrot.slane %v865, 1
        %v867 = vadd.f32 %v865, %v866
        %s868 = vtos %v867
        %vm869 = vcmp.ge.f32.partialorder %v455, 2.5823677
        %vm870 = vcmp.ge.f32.partialorder %v456, 2.5823677
        %v871 = vsel %vm869, %v455, 0.0
        %v872 = vsel %vm870, %v456, 0.0
        %v873 = vsel %vm478, %v871, 0.0
        %v874 = vsel %vm478, %v872, 0.0
        %v875 = vadd.f32 %v873, %v874
        %876 = vadd.xlane.f32.xlu0 %v875
        %v877 = vpop.xlane.xlu0 %876
        %v878 = vrot.slane %v877, 4
        %v879 = vadd.f32 %v877, %v878
        %v880 = vrot.slane %v879, 2
        %v881 = vadd.f32 %v879, %v880
        %v882 = vrot.slane %v881, 1
        %v883 = vadd.f32 %v881, %v882
        %s884 = vtos %v883
        %s885 = ssub.f32 %s580, %s596
        %vm886 = vcmp.eq.s32.totalorder %v360, 1
        %v887 = vstv %s885
        %v888 = vsel %vm886, %v887, %v568
        %s889 = ssub.f32 %s596, %s612
        %vm890 = vcmp.eq.s32.totalorder %v360, 2
        %v891 = vstv %s889
        %v892 = vsel %vm890, %v891, %v888
        %s893 = ssub.f32 %s612, %s628
        %vm894 = vcmp.eq.s32.totalorder %v360, 3
        %v895 = vstv %s893
        %v896 = vsel %vm894, %v895, %v892
        %s897 = ssub.f32 %s628, %s644
        %vm898 = vcmp.eq.s32.totalorder %v360, 4
        %v899 = vstv %s897
        %v900 = vsel %vm898, %v899, %v896
        %s901 = ssub.f32 %s644, %s660
        %vm902 = vcmp.eq.s32.totalorder %v360, 5
        %v903 = vstv %s901
        %v904 = vsel %vm902, %v903, %v900
        %s905 = ssub.f32 %s660, %s676
        %vm906 = vcmp.eq.s32.totalorder %v360, 6
        %v907 = vstv %s905
        %v908 = vsel %vm906, %v907, %v904
        %s909 = ssub.f32 %s676, %s692
        %vm910 = vcmp.eq.s32.totalorder %v360, 7
        %v911 = vstv %s909
        %v912 = vsel %vm910, %v911, %v908
        %s913 = ssub.f32 %s692, %s708
        %vm914 = vcmp.eq.s32.totalorder %v360, 8
        %v915 = vstv %s913
        %v916 = vsel %vm914, %v915, %v912
        %s917 = ssub.f32 %s708, %s724
        %vm918 = vcmp.eq.s32.totalorder %v360, 9
        %v919 = vstv %s917
        %v920 = vsel %vm918, %v919, %v916
        %s921 = ssub.f32 %s724, %s740
        %vm922 = vcmp.eq.s32.totalorder %v360, 10
        %v923 = vstv %s921
        %v924 = vsel %vm922, %v923, %v920
        %s925 = ssub.f32 %s740, %s756
        %vm926 = vcmp.eq.s32.totalorder %v360, 11
        %v927 = vstv %s925
        %v928 = vsel %vm926, %v927, %v924
        %s929 = ssub.f32 %s756, %s772
        %vm930 = vcmp.eq.s32.totalorder %v360, 12
        %v931 = vstv %s929
        %v932 = vsel %vm930, %v931, %v928
        %s933 = ssub.f32 %s772, %s788
        %vm934 = vcmp.eq.s32.totalorder %v360, 13
        %v935 = vstv %s933
        %v936 = vsel %vm934, %v935, %v932
        %s937 = ssub.f32 %s788, %s804
        %vm938 = vcmp.eq.s32.totalorder %v360, 14
        %v939 = vstv %s937
        %v940 = vsel %vm938, %v939, %v936
        %s941 = ssub.f32 %s804, %s820
        %vm942 = vcmp.eq.s32.totalorder %v360, 15
        %v943 = vstv %s941
        %v944 = vsel %vm942, %v943, %v940
        %s945 = ssub.f32 %s820, %s836
        %vm946 = vcmp.eq.s32.totalorder %v360, 16
        %v947 = vstv %s945
        %v948 = vsel %vm946, %v947, %v944
        %s949 = ssub.f32 %s836, %s852
        %vm950 = vcmp.eq.s32.totalorder %v360, 17
        %v951 = vstv %s949
        %v952 = vsel %vm950, %v951, %v948
        %s953 = ssub.f32 %s852, %s868
        %vm954 = vcmp.eq.s32.totalorder %v360, 18
        %v955 = vstv %s953
        %v956 = vsel %vm954, %v955, %v952
        %s957 = ssub.f32 %s868, %s884
        %vm958 = vcmp.eq.s32.totalorder %v360, 19
        %v959 = vstv %s957
        %v960 = vsel %vm958, %v959, %v956
        %vm961 = vcmp.eq.s32.totalorder %v360, 20
        %v962 = vstv %s884
        %v963 = vsel %vm961, %v962, %v960
        %v964 = vld [vmem:[%s338] sm:$0x1]
        %v965 = vadd.f32 %v964, %v963
        %966 = vst [vmem:[%s338] sm:$0x1] %v965
        %v967 = vld [vmem:[%s302] sm:$0xff]
        %v968 = vld [vmem:[%s302 + $0x8] sm:$0xff]
        %v969 = vld [vmem:[%s302 + $0x10] sm:$0xff]
        %v970 = vld [vmem:[%s302 + $0x18] sm:$0xff]
        %v971 = vld [vmem:[%s302 + $0x20] sm:$0xff]
        %v972 = vld [vmem:[%s302 + $0x28] sm:$0xff]
        %v973 = vmax.f32 %v967, 1e-06
        %v974 = vmax.f32 %v968, 1e-06
        %v975 = vlog2.pop %v973
        %v976 = vmul.f32 %v975, 0.6931472
        %v977 = vlog2.pop %v974
        %v978 = vmul.f32 %v977, 0.6931472
        %v979 = vmul.f32 %v976, -0.07238241
        %v980 = vmul.f32 %v978, -0.07238241
        %v981 = vmax.f32 %v969, 1e-06
        %v982 = vmax.f32 %v970, 1e-06
        %v983 = vlog2.pop %v981
        %v984 = vmul.f32 %v983, 0.6931472
        %v985 = vlog2.pop %v982
        %v986 = vmul.f32 %v985, 0.6931472
        %v987 = vmul.f32 %v984, -0.07238241
        %v988 = vmul.f32 %v986, -0.07238241
        %v989 = vmax.f32 %v971, 1e-06
        %v990 = vmax.f32 %v972, 1e-06
        %v991 = vlog2.pop %v989
        %v992 = vmul.f32 %v991, 0.6931472
        %v993 = vlog2.pop %v990
        %v994 = vmul.f32 %v993, 0.6931472
        %v995 = vmul.f32 %v992, -0.07238241
        %v996 = vmul.f32 %v994, -0.07238241
        %v997 = vmul.f32 %v979, -0.55611587
        %v998 = vmul.f32 %v980, -0.55611587
        %v999 = vmul.f32 %v987, -0.1355218
        %v1000 = vmul.f32 %v988, -0.1355218
        %v1001 = vadd.f32 %v997, %v999
        %v1002 = vadd.f32 %v998, %v1000
        %v1003 = vmul.f32 %v995, 1.5735881
        %v1004 = vmul.f32 %v996, 1.5735881
        %v1005 = vadd.f32 %v1001, %v1003
        %v1006 = vadd.f32 %v1002, %v1004
        %v1007 = vmax.f32 %v1005, 0.0
        %v1008 = vmax.f32 %v1006, 0.0
        %v1009 = vmul.f32 %v1007, -3.730188
        %v1010 = vmul.f32 %v1008, -3.730188
        %v1011 = vmul.f32 %v1009, 1.442695
        %v1012 = vpow.pop %v1011
        %v1013 = vmul.f32 %v1010, 1.442695
        %v1014 = vpow.pop %v1013
        %v1015 = vmul.f32 %v1012, 0.2125
        %v1016 = vmul.f32 %v1014, 0.2125
        %v1017 = vmul.f32 %v1007, -7.8748407
        %v1018 = vmul.f32 %v1008, -7.8748407
        %v1019 = vmul.f32 %v1017, 1.442695
        %v1020 = vpow.pop %v1019
        %v1021 = vmul.f32 %v1018, 1.442695
        %v1022 = vpow.pop %v1021
        %v1023 = vmul.f32 %v1020, 0.7154
        %v1024 = vmul.f32 %v1022, 0.7154
        %v1025 = vadd.f32 %v1015, %v1023
        %v1026 = vadd.f32 %v1016, %v1024
        %v1027 = vmul.f32 %v1007, -10.776098
        %v1028 = vmul.f32 %v1008, -10.776098
        %v1029 = vmul.f32 %v1027, 1.442695
        %v1030 = vpow.pop %v1029
        %v1031 = vmul.f32 %v1028, 1.442695
        %v1032 = vpow.pop %v1031
        %v1033 = vmul.f32 %v1030, 0.0721
        %v1034 = vmul.f32 %v1032, 0.0721
        %v1035 = vadd.f32 %v1025, %v1033
        %v1036 = vadd.f32 %v1026, %v1034
        %v1037 = vadd.f32 %v1035, 0.018075528
        %v1038 = vadd.f32 %v1036, 0.018075528
        %v1039 = vlog2.pop %v1037
        %v1040 = vmul.f32 %v1039, 0.6931472
        %v1041 = vlog2.pop %v1038
        %v1042 = vmul.f32 %v1041, 0.6931472
        %v1043 = vmul.f32 %v1040, -0.4342945
        %v1044 = vmul.f32 %v1042, -0.4342945
        %v1045 = vmax.f32 %v1043, 0.0
        %v1046 = vmax.f32 %v1044, 0.0
        %vm1047 = vcmp.gt.f32.partialorder %v1045, 0.0
        %vm1048 = vcmp.gt.f32.partialorder %v1046, 0.0
        %v1049 = vmax.f32 %v1045, 1e-30
        %v1050 = vmax.f32 %v1046, 1e-30
        %v1051 = vlog2.pop %v1049
        %v1052 = vmul.f32 %v1051, 0.6931472
        %v1053 = vlog2.pop %v1050
        %v1054 = vmul.f32 %v1053, 0.6931472
        %v1055 = vmul.f32 %v1052, 1.8
        %v1056 = vmul.f32 %v1054, 1.8
        %v1057 = vmul.f32 %v1055, 1.442695
        %v1058 = vpow.pop %v1057
        %v1059 = vmul.f32 %v1056, 1.442695
        %v1060 = vpow.pop %v1059
        %v1061 = vsel %vm1047, %v1058, 0.0
        %v1062 = vsel %vm1048, %v1060, 0.0
        %vm1063 = vcmp.lt.f32.partialorder %v1061, 0.15
        %vm1064 = vcmp.lt.f32.partialorder %v1062, 0.15
        %v1065 = vsel %vm1063, 0.0, %v1061
        %v1066 = vsel %vm1064, 0.0, %v1062
        %vm1067 = vcmp.ge.f32.partialorder %v1061, 0.68
        %vm1068 = vcmp.ge.f32.partialorder %v1062, 0.68
        %v1069 = vsel %vm1067, 1, 0
        %v1070 = vsel %vm1068, 1, 0
        %v1071 = vcvt.s32.f32 %v1069
        %v1072 = vcvt.s32.f32 %v1070
        %v1073 = vpack.c.bf16 %v1072, %v1071
        %v1075 = vunpack.c.l.b16 %v1073
        %v1076 = vunpack.c.h.b16 %v1073
        %v1077 = vpack.c.b16 %v1075, %v1075
        %v1078 = vpack.c.b16 %v1076, %v1076
        %s1081 = scalar_lea.vmem %s344, 8 [#allocation10]
        %1082 = vst.msk [vmem:[%s1081] sm:$0xf] %vm475, %v1077
        %1083 = vst.msk [vmem:[%s1081 + $0x4] sm:$0xf] %vm475, %v1078
        %v1085 = vsel %vm478, %v1065, 0
        %v1088 = vsel %vm478, %v1066, 0
        %1090 = vmatprep.subr.mxu0 0.0
        %1091 = vmatpush1.msra.mxu0 0.0
        %1092 = vmatprep.subr.mxu0 0.0
        %1093 = vmatpush1.msra.mxu0 0.0
        %1094 = vmatprep.subr.mxu0 0.0
        %1095 = vmatpush1.msra.mxu0 0.0
        %1096 = vmatprep.subr.mxu0 0.0
        %1097 = vmatpush1.msra.mxu0 0.0
        %1098 = vmatprep.subr.mxu0 0.0
        %1099 = vmatpush1.msra.mxu0 0.0
        %1100 = vmatprep.subr.mxu0 0.0
        %1101 = vmatpush1.msra.mxu0 0.0
        %1102 = vmatprep.subr.mxu0 0.0
        %1103 = vmatpush1.msra.mxu0 0.0
        %1104 = vmatprep.subr.mxu0 0.0
        %1105 = vmatpush1.msra.mxu0 0.0
        %1106 = vmatprep.subr.mxu0 0.0
        %1107 = vmatpush1.msra.mxu0 0.0
        %1108 = vmatprep.subr.mxu0 0.0
        %1109 = vmatpush1.msra.mxu0 0.0
        %1110 = vmatprep.subr.mxu0 0.0
        %1111 = vmatpush1.msra.mxu0 0.0
        %1112 = vmatprep.subr.mxu0 0.0
        %1113 = vmatpush1.msra.mxu0 0.0
        %1114 = vmatprep.subr.mxu0 0.0
        %1115 = vmatpush1.msra.mxu0 0.0
        %1116 = vmatprep.subr.mxu0 0.0
        %1117 = vmatpush1.msra.mxu0 0.0
        %1118 = vmatprep.subr.mxu0 0.0
        %1119 = vmatpush1.msra.mxu0 %v356
        %1120 = vmatprep.subr.mxu0 0.0
        %1121 = vmatpush1.msra.mxu0 %v355
        %1122 = vmatprep.subr.mxu0 0.0
        %1123 = vmatpush2.msra.mxu0 0.0
        %1124 = vmatprep.subr.mxu0 0.0
        %1125 = vmatpush2.msra.mxu0 0.0
        %1126 = vmatprep.subr.mxu0 0.0
        %1127 = vmatpush2.msra.mxu0 0.0
        %1128 = vmatprep.subr.mxu0 0.0
        %1129 = vmatpush2.msra.mxu0 0.0
        %1130 = vmatprep.subr.mxu0 0.0
        %1131 = vmatpush2.msra.mxu0 0.0
        %1132 = vmatprep.subr.mxu0 0.0
        %1133 = vmatpush2.msra.mxu0 0.0
        %1134 = vmatprep.subr.mxu0 0.0
        %1135 = vmatpush2.msra.mxu0 0.0
        %1136 = vmatprep.subr.mxu0 0.0
        %1137 = vmatpush2.msra.mxu0 0.0
        %1138 = vmatprep.subr.mxu0 0.0
        %1139 = vmatpush2.msra.mxu0 0.0
        %1140 = vmatprep.subr.mxu0 0.0
        %1141 = vmatpush2.msra.mxu0 0.0
        %1142 = vmatprep.subr.mxu0 0.0
        %1143 = vmatpush2.msra.mxu0 0.0
        %1144 = vmatprep.subr.mxu0 0.0
        %1145 = vmatpush2.msra.mxu0 0.0
        %1146 = vmatprep.subr.mxu0 0.0
        %1147 = vmatpush2.msra.mxu0 0.0
        %1148 = vmatprep.subr.mxu0 0.0
        %1149 = vmatpush2.msra.mxu0 0.0
        %1150 = vmatprep.subr.mxu0 0.0
        %1151 = vmatpush2.msra.mxu0 0.0
        %1152 = vmatprep.subr.mxu0 0.0
        %1153 = vmatpush2.msra.mxu0 0.0
        %1154 = vmatprep.mubr.f32.mxu0 0.0
        %1155 = vmatmul.mubr.f32.gmra.mxu0 %v1085
        %v1156 = vpop.f32.mrf.mxu0
        %v1157 = vadd.f32 0.0, %v1156
        %v1158 = vpop.f32.mrf.mxu0
        %1159 = vmatprep.mubr.f32.mxu0 0.0
        %1160 = vmatmul.mubr.f32.gmra.mxu0 %v1088
        %v1161 = vpop.f32.mrf.mxu0
        %v1162 = vadd.f32 0.0, %v1161
        %v1163 = vpop.f32.mrf.mxu0
        %1164 = vdwg.mxu0
        %v1165 = vmul.f32 %v1157, %v357
        %v1166 = vmul.f32 %v1162, %v358
        %v1167 = vadd.f32 %v1165, %v1166
        %v1168 = vrot.slane %v1167, 4
        %v1169 = vadd.f32 %v1167, %v1168
        %v1170 = vrot.slane %v1169, 2
        %v1171 = vadd.f32 %v1169, %v1170
        %v1172 = vrot.slane %v1171, 1
        %v1173 = vadd.f32 %v1171, %v1172
        %v1174 = vsel %vm478, %v1061, 0.0
        %v1175 = vsel %vm478, %v1062, 0.0
        %v1176 = vadd.f32 %v1174, %v1175
        %1177 = vadd.xlane.f32.xlu0 %v1176
        %v1178 = vpop.xlane.xlu0 %1177
        %v1179 = vrot.slane %v1178, 4
        %v1180 = vadd.f32 %v1178, %v1179
        %v1181 = vrot.slane %v1180, 2
        %v1182 = vadd.f32 %v1180, %v1181
        %v1183 = vrot.slane %v1182, 1
        %v1184 = vadd.f32 %v1182, %v1183
        %s1185 = vtos %v1184
        %vm1186 = vcmp.ge.f32.partialorder %v1061, 0.13591409
        %vm1187 = vcmp.ge.f32.partialorder %v1062, 0.13591409
        %v1188 = vsel %vm1186, %v1061, 0.0
        %v1189 = vsel %vm1187, %v1062, 0.0
        %v1190 = vsel %vm478, %v1188, 0.0
        %v1191 = vsel %vm478, %v1189, 0.0
        %v1192 = vadd.f32 %v1190, %v1191
        %1193 = vadd.xlane.f32.xlu0 %v1192
        %v1194 = vpop.xlane.xlu0 %1193
        %v1195 = vrot.slane %v1194, 4
        %v1196 = vadd.f32 %v1194, %v1195
        %v1197 = vrot.slane %v1196, 2
        %v1198 = vadd.f32 %v1196, %v1197
        %v1199 = vrot.slane %v1198, 1
        %v1200 = vadd.f32 %v1198, %v1199
        %s1201 = vtos %v1200
        %vm1202 = vcmp.ge.f32.partialorder %v1061, 0.27182817
        %vm1203 = vcmp.ge.f32.partialorder %v1062, 0.27182817
        %v1204 = vsel %vm1202, %v1061, 0.0
        %v1205 = vsel %vm1203, %v1062, 0.0
        %v1206 = vsel %vm478, %v1204, 0.0
        %v1207 = vsel %vm478, %v1205, 0.0
        %v1208 = vadd.f32 %v1206, %v1207
        %1209 = vadd.xlane.f32.xlu0 %v1208
        %v1210 = vpop.xlane.xlu0 %1209
        %v1211 = vrot.slane %v1210, 4
        %v1212 = vadd.f32 %v1210, %v1211
        %v1213 = vrot.slane %v1212, 2
        %v1214 = vadd.f32 %v1212, %v1213
        %v1215 = vrot.slane %v1214, 1
        %v1216 = vadd.f32 %v1214, %v1215
        %s1217 = vtos %v1216
        %vm1218 = vcmp.ge.f32.partialorder %v1061, 0.40774226
        %vm1219 = vcmp.ge.f32.partialorder %v1062, 0.40774226
        %v1220 = vsel %vm1218, %v1061, 0.0
        %v1221 = vsel %vm1219, %v1062, 0.0
        %v1222 = vsel %vm478, %v1220, 0.0
        %v1223 = vsel %vm478, %v1221, 0.0
        %v1224 = vadd.f32 %v1222, %v1223
        %1225 = vadd.xlane.f32.xlu0 %v1224
        %v1226 = vpop.xlane.xlu0 %1225
        %v1227 = vrot.slane %v1226, 4
        %v1228 = vadd.f32 %v1226, %v1227
        %v1229 = vrot.slane %v1228, 2
        %v1230 = vadd.f32 %v1228, %v1229
        %v1231 = vrot.slane %v1230, 1
        %v1232 = vadd.f32 %v1230, %v1231
        %s1233 = vtos %v1232
        %vm1234 = vcmp.ge.f32.partialorder %v1061, 0.54365635
        %vm1235 = vcmp.ge.f32.partialorder %v1062, 0.54365635
        %v1236 = vsel %vm1234, %v1061, 0.0
        %v1237 = vsel %vm1235, %v1062, 0.0
        %v1238 = vsel %vm478, %v1236, 0.0
        %v1239 = vsel %vm478, %v1237, 0.0
        %v1240 = vadd.f32 %v1238, %v1239
        %1241 = vadd.xlane.f32.xlu0 %v1240
        %v1242 = vpop.xlane.xlu0 %1241
        %v1243 = vrot.slane %v1242, 4
        %v1244 = vadd.f32 %v1242, %v1243
        %v1245 = vrot.slane %v1244, 2
        %v1246 = vadd.f32 %v1244, %v1245
        %v1247 = vrot.slane %v1246, 1
        %v1248 = vadd.f32 %v1246, %v1247
        %s1249 = vtos %v1248
        %vm1250 = vcmp.ge.f32.partialorder %v1061, 0.67957044
        %vm1251 = vcmp.ge.f32.partialorder %v1062, 0.67957044
        %v1252 = vsel %vm1250, %v1061, 0.0
        %v1253 = vsel %vm1251, %v1062, 0.0
        %v1254 = vsel %vm478, %v1252, 0.0
        %v1255 = vsel %vm478, %v1253, 0.0
        %v1256 = vadd.f32 %v1254, %v1255
        %1257 = vadd.xlane.f32.xlu0 %v1256
        %v1258 = vpop.xlane.xlu0 %1257
        %v1259 = vrot.slane %v1258, 4
        %v1260 = vadd.f32 %v1258, %v1259
        %v1261 = vrot.slane %v1260, 2
        %v1262 = vadd.f32 %v1260, %v1261
        %v1263 = vrot.slane %v1262, 1
        %v1264 = vadd.f32 %v1262, %v1263
        %s1265 = vtos %v1264
        %vm1266 = vcmp.ge.f32.partialorder %v1061, 0.8154845
        %vm1267 = vcmp.ge.f32.partialorder %v1062, 0.8154845
        %v1268 = vsel %vm1266, %v1061, 0.0
        %v1269 = vsel %vm1267, %v1062, 0.0
        %v1270 = vsel %vm478, %v1268, 0.0
        %v1271 = vsel %vm478, %v1269, 0.0
        %v1272 = vadd.f32 %v1270, %v1271
        %1273 = vadd.xlane.f32.xlu0 %v1272
        %v1274 = vpop.xlane.xlu0 %1273
        %v1275 = vrot.slane %v1274, 4
        %v1276 = vadd.f32 %v1274, %v1275
        %v1277 = vrot.slane %v1276, 2
        %v1278 = vadd.f32 %v1276, %v1277
        %v1279 = vrot.slane %v1278, 1
        %v1280 = vadd.f32 %v1278, %v1279
        %s1281 = vtos %v1280
        %vm1282 = vcmp.ge.f32.partialorder %v1061, 0.9513986
        %vm1283 = vcmp.ge.f32.partialorder %v1062, 0.9513986
        %v1284 = vsel %vm1282, %v1061, 0.0
        %v1285 = vsel %vm1283, %v1062, 0.0
        %v1286 = vsel %vm478, %v1284, 0.0
        %v1287 = vsel %vm478, %v1285, 0.0
        %v1288 = vadd.f32 %v1286, %v1287
        %1289 = vadd.xlane.f32.xlu0 %v1288
        %v1290 = vpop.xlane.xlu0 %1289
        %v1291 = vrot.slane %v1290, 4
        %v1292 = vadd.f32 %v1290, %v1291
        %v1293 = vrot.slane %v1292, 2
        %v1294 = vadd.f32 %v1292, %v1293
        %v1295 = vrot.slane %v1294, 1
        %v1296 = vadd.f32 %v1294, %v1295
        %s1297 = vtos %v1296
        %vm1298 = vcmp.ge.f32.partialorder %v1061, 1.0873127
        %vm1299 = vcmp.ge.f32.partialorder %v1062, 1.0873127
        %v1300 = vsel %vm1298, %v1061, 0.0
        %v1301 = vsel %vm1299, %v1062, 0.0
        %v1302 = vsel %vm478, %v1300, 0.0
        %v1303 = vsel %vm478, %v1301, 0.0
        %v1304 = vadd.f32 %v1302, %v1303
        %1305 = vadd.xlane.f32.xlu0 %v1304
        %v1306 = vpop.xlane.xlu0 %1305
        %v1307 = vrot.slane %v1306, 4
        %v1308 = vadd.f32 %v1306, %v1307
        %v1309 = vrot.slane %v1308, 2
        %v1310 = vadd.f32 %v1308, %v1309
        %v1311 = vrot.slane %v1310, 1
        %v1312 = vadd.f32 %v1310, %v1311
        %s1313 = vtos %v1312
        %vm1314 = vcmp.ge.f32.partialorder %v1061, 1.2232268
        %vm1315 = vcmp.ge.f32.partialorder %v1062, 1.2232268
        %v1316 = vsel %vm1314, %v1061, 0.0
        %v1317 = vsel %vm1315, %v1062, 0.0
        %v1318 = vsel %vm478, %v1316, 0.0
        %v1319 = vsel %vm478, %v1317, 0.0
        %v1320 = vadd.f32 %v1318, %v1319
        %1321 = vadd.xlane.f32.xlu0 %v1320
        %v1322 = vpop.xlane.xlu0 %1321
        %v1323 = vrot.slane %v1322, 4
        %v1324 = vadd.f32 %v1322, %v1323
        %v1325 = vrot.slane %v1324, 2
        %v1326 = vadd.f32 %v1324, %v1325
        %v1327 = vrot.slane %v1326, 1
        %v1328 = vadd.f32 %v1326, %v1327
        %s1329 = vtos %v1328
        %vm1330 = vcmp.ge.f32.partialorder %v1061, 1.3591409
        %vm1331 = vcmp.ge.f32.partialorder %v1062, 1.3591409
        %v1332 = vsel %vm1330, %v1061, 0.0
        %v1333 = vsel %vm1331, %v1062, 0.0
        %v1334 = vsel %vm478, %v1332, 0.0
        %v1335 = vsel %vm478, %v1333, 0.0
        %v1336 = vadd.f32 %v1334, %v1335
        %1337 = vadd.xlane.f32.xlu0 %v1336
        %v1338 = vpop.xlane.xlu0 %1337
        %v1339 = vrot.slane %v1338, 4
        %v1340 = vadd.f32 %v1338, %v1339
        %v1341 = vrot.slane %v1340, 2
        %v1342 = vadd.f32 %v1340, %v1341
        %v1343 = vrot.slane %v1342, 1
        %v1344 = vadd.f32 %v1342, %v1343
        %s1345 = vtos %v1344
        %vm1346 = vcmp.ge.f32.partialorder %v1061, 1.495055
        %vm1347 = vcmp.ge.f32.partialorder %v1062, 1.495055
        %v1348 = vsel %vm1346, %v1061, 0.0
        %v1349 = vsel %vm1347, %v1062, 0.0
        %v1350 = vsel %vm478, %v1348, 0.0
        %v1351 = vsel %vm478, %v1349, 0.0
        %v1352 = vadd.f32 %v1350, %v1351
        %1353 = vadd.xlane.f32.xlu0 %v1352
        %v1354 = vpop.xlane.xlu0 %1353
        %v1355 = vrot.slane %v1354, 4
        %v1356 = vadd.f32 %v1354, %v1355
        %v1357 = vrot.slane %v1356, 2
        %v1358 = vadd.f32 %v1356, %v1357
        %v1359 = vrot.slane %v1358, 1
        %v1360 = vadd.f32 %v1358, %v1359
        %s1361 = vtos %v1360
        %vm1362 = vcmp.ge.f32.partialorder %v1061, 1.630969
        %vm1363 = vcmp.ge.f32.partialorder %v1062, 1.630969
        %v1364 = vsel %vm1362, %v1061, 0.0
        %v1365 = vsel %vm1363, %v1062, 0.0
        %v1366 = vsel %vm478, %v1364, 0.0
        %v1367 = vsel %vm478, %v1365, 0.0
        %v1368 = vadd.f32 %v1366, %v1367
        %1369 = vadd.xlane.f32.xlu0 %v1368
        %v1370 = vpop.xlane.xlu0 %1369
        %v1371 = vrot.slane %v1370, 4
        %v1372 = vadd.f32 %v1370, %v1371
        %v1373 = vrot.slane %v1372, 2
        %v1374 = vadd.f32 %v1372, %v1373
        %v1375 = vrot.slane %v1374, 1
        %v1376 = vadd.f32 %v1374, %v1375
        %s1377 = vtos %v1376
        %vm1378 = vcmp.ge.f32.partialorder %v1061, 1.7668831
        %vm1379 = vcmp.ge.f32.partialorder %v1062, 1.7668831
        %v1380 = vsel %vm1378, %v1061, 0.0
        %v1381 = vsel %vm1379, %v1062, 0.0
        %v1382 = vsel %vm478, %v1380, 0.0
        %v1383 = vsel %vm478, %v1381, 0.0
        %v1384 = vadd.f32 %v1382, %v1383
        %1385 = vadd.xlane.f32.xlu0 %v1384
        %v1386 = vpop.xlane.xlu0 %1385
        %v1387 = vrot.slane %v1386, 4
        %v1388 = vadd.f32 %v1386, %v1387
        %v1389 = vrot.slane %v1388, 2
        %v1390 = vadd.f32 %v1388, %v1389
        %v1391 = vrot.slane %v1390, 1
        %v1392 = vadd.f32 %v1390, %v1391
        %s1393 = vtos %v1392
        %vm1394 = vcmp.ge.f32.partialorder %v1061, 1.9027972
        %vm1395 = vcmp.ge.f32.partialorder %v1062, 1.9027972
        %v1396 = vsel %vm1394, %v1061, 0.0
        %v1397 = vsel %vm1395, %v1062, 0.0
        %v1398 = vsel %vm478, %v1396, 0.0
        %v1399 = vsel %vm478, %v1397, 0.0
        %v1400 = vadd.f32 %v1398, %v1399
        %1401 = vadd.xlane.f32.xlu0 %v1400
        %v1402 = vpop.xlane.xlu0 %1401
        %v1403 = vrot.slane %v1402, 4
        %v1404 = vadd.f32 %v1402, %v1403
        %v1405 = vrot.slane %v1404, 2
        %v1406 = vadd.f32 %v1404, %v1405
        %v1407 = vrot.slane %v1406, 1
        %v1408 = vadd.f32 %v1406, %v1407
        %s1409 = vtos %v1408
        %vm1410 = vcmp.ge.f32.partialorder %v1061, 2.0387113
        %vm1411 = vcmp.ge.f32.partialorder %v1062, 2.0387113
        %v1412 = vsel %vm1410, %v1061, 0.0
        %v1413 = vsel %vm1411, %v1062, 0.0
        %v1414 = vsel %vm478, %v1412, 0.0
        %v1415 = vsel %vm478, %v1413, 0.0
        %v1416 = vadd.f32 %v1414, %v1415
        %1417 = vadd.xlane.f32.xlu0 %v1416
        %v1418 = vpop.xlane.xlu0 %1417
        %v1419 = vrot.slane %v1418, 4
        %v1420 = vadd.f32 %v1418, %v1419
        %v1421 = vrot.slane %v1420, 2
        %v1422 = vadd.f32 %v1420, %v1421
        %v1423 = vrot.slane %v1422, 1
        %v1424 = vadd.f32 %v1422, %v1423
        %s1425 = vtos %v1424
        %vm1426 = vcmp.ge.f32.partialorder %v1061, 2.1746254
        %vm1427 = vcmp.ge.f32.partialorder %v1062, 2.1746254
        %v1428 = vsel %vm1426, %v1061, 0.0
        %v1429 = vsel %vm1427, %v1062, 0.0
        %v1430 = vsel %vm478, %v1428, 0.0
        %v1431 = vsel %vm478, %v1429, 0.0
        %v1432 = vadd.f32 %v1430, %v1431
        %1433 = vadd.xlane.f32.xlu0 %v1432
        %v1434 = vpop.xlane.xlu0 %1433
        %v1435 = vrot.slane %v1434, 4
        %v1436 = vadd.f32 %v1434, %v1435
        %v1437 = vrot.slane %v1436, 2
        %v1438 = vadd.f32 %v1436, %v1437
        %v1439 = vrot.slane %v1438, 1
        %v1440 = vadd.f32 %v1438, %v1439
        %s1441 = vtos %v1440
        %vm1442 = vcmp.ge.f32.partialorder %v1061, 2.3105395
        %vm1443 = vcmp.ge.f32.partialorder %v1062, 2.3105395
        %v1444 = vsel %vm1442, %v1061, 0.0
        %v1445 = vsel %vm1443, %v1062, 0.0
        %v1446 = vsel %vm478, %v1444, 0.0
        %v1447 = vsel %vm478, %v1445, 0.0
        %v1448 = vadd.f32 %v1446, %v1447
        %1449 = vadd.xlane.f32.xlu0 %v1448
        %v1450 = vpop.xlane.xlu0 %1449
        %v1451 = vrot.slane %v1450, 4
        %v1452 = vadd.f32 %v1450, %v1451
        %v1453 = vrot.slane %v1452, 2
        %v1454 = vadd.f32 %v1452, %v1453
        %v1455 = vrot.slane %v1454, 1
        %v1456 = vadd.f32 %v1454, %v1455
        %s1457 = vtos %v1456
        %vm1458 = vcmp.ge.f32.partialorder %v1061, 2.4464536
        %vm1459 = vcmp.ge.f32.partialorder %v1062, 2.4464536
        %v1460 = vsel %vm1458, %v1061, 0.0
        %v1461 = vsel %vm1459, %v1062, 0.0
        %v1462 = vsel %vm478, %v1460, 0.0
        %v1463 = vsel %vm478, %v1461, 0.0
        %v1464 = vadd.f32 %v1462, %v1463
        %1465 = vadd.xlane.f32.xlu0 %v1464
        %v1466 = vpop.xlane.xlu0 %1465
        %v1467 = vrot.slane %v1466, 4
        %v1468 = vadd.f32 %v1466, %v1467
        %v1469 = vrot.slane %v1468, 2
        %v1470 = vadd.f32 %v1468, %v1469
        %v1471 = vrot.slane %v1470, 1
        %v1472 = vadd.f32 %v1470, %v1471
        %s1473 = vtos %v1472
        %vm1474 = vcmp.ge.f32.partialorder %v1061, 2.5823677
        %vm1475 = vcmp.ge.f32.partialorder %v1062, 2.5823677
        %v1476 = vsel %vm1474, %v1061, 0.0
        %v1477 = vsel %vm1475, %v1062, 0.0
        %v1478 = vsel %vm478, %v1476, 0.0
        %v1479 = vsel %vm478, %v1477, 0.0
        %v1480 = vadd.f32 %v1478, %v1479
        %1481 = vadd.xlane.f32.xlu0 %v1480
        %v1482 = vpop.xlane.xlu0 %1481
        %v1483 = vrot.slane %v1482, 4
        %v1484 = vadd.f32 %v1482, %v1483
        %v1485 = vrot.slane %v1484, 2
        %v1486 = vadd.f32 %v1484, %v1485
        %v1487 = vrot.slane %v1486, 1
        %v1488 = vadd.f32 %v1486, %v1487
        %s1489 = vtos %v1488
        %s1490 = ssub.f32 %s1185, %s1201
        %v1491 = vstv %s1490
        %v1492 = vsel %vm886, %v1491, %v1173
        %s1493 = ssub.f32 %s1201, %s1217
        %v1494 = vstv %s1493
        %v1495 = vsel %vm890, %v1494, %v1492
        %s1496 = ssub.f32 %s1217, %s1233
        %v1497 = vstv %s1496
        %v1498 = vsel %vm894, %v1497, %v1495
        %s1499 = ssub.f32 %s1233, %s1249
        %v1500 = vstv %s1499
        %v1501 = vsel %vm898, %v1500, %v1498
        %s1502 = ssub.f32 %s1249, %s1265
        %v1503 = vstv %s1502
        %v1504 = vsel %vm902, %v1503, %v1501
        %s1505 = ssub.f32 %s1265, %s1281
        %v1506 = vstv %s1505
        %v1507 = vsel %vm906, %v1506, %v1504
        %s1508 = ssub.f32 %s1281, %s1297
        %v1509 = vstv %s1508
        %v1510 = vsel %vm910, %v1509, %v1507
        %s1511 = ssub.f32 %s1297, %s1313
        %v1512 = vstv %s1511
        %v1513 = vsel %vm914, %v1512, %v1510
        %s1514 = ssub.f32 %s1313, %s1329
        %v1515 = vstv %s1514
        %v1516 = vsel %vm918, %v1515, %v1513
        %s1517 = ssub.f32 %s1329, %s1345
        %v1518 = vstv %s1517
        %v1519 = vsel %vm922, %v1518, %v1516
        %s1520 = ssub.f32 %s1345, %s1361
        %v1521 = vstv %s1520
        %v1522 = vsel %vm926, %v1521, %v1519
        %s1523 = ssub.f32 %s1361, %s1377
        %v1524 = vstv %s1523
        %v1525 = vsel %vm930, %v1524, %v1522
        %s1526 = ssub.f32 %s1377, %s1393
        %v1527 = vstv %s1526
        %v1528 = vsel %vm934, %v1527, %v1525
        %s1529 = ssub.f32 %s1393, %s1409
        %v1530 = vstv %s1529
        %v1531 = vsel %vm938, %v1530, %v1528
        %s1532 = ssub.f32 %s1409, %s1425
        %v1533 = vstv %s1532
        %v1534 = vsel %vm942, %v1533, %v1531
        %s1535 = ssub.f32 %s1425, %s1441
        %v1536 = vstv %s1535
        %v1537 = vsel %vm946, %v1536, %v1534
        %s1538 = ssub.f32 %s1441, %s1457
        %v1539 = vstv %s1538
        %v1540 = vsel %vm950, %v1539, %v1537
        %s1541 = ssub.f32 %s1457, %s1473
        %v1542 = vstv %s1541
        %v1543 = vsel %vm954, %v1542, %v1540
        %s1544 = ssub.f32 %s1473, %s1489
        %v1545 = vstv %s1544
        %v1546 = vsel %vm958, %v1545, %v1543
        %v1547 = vstv %s1489
        %v1548 = vsel %vm961, %v1547, %v1546
        %s1549 = scalar_lea.vmem %s338, 1 [#allocation9]
        %v1550 = vld [vmem:[%s1549] sm:$0x1]
        %v1551 = vadd.f32 %v1550, %v1548
        %1552 = vst [vmem:[%s1549] sm:$0x1] %v1551
        %s1553 = sand.u32 %s147, 1
        %s1554 = sand.u32 %s147, 1
        %s1555 = smul.addr %s1554, 2
        %s1556 = scalar_lea.vmem [#allocation9], %s1555
        %s1557 = sand.u32 %s175, 1
        %s1558 = sand.u32 %s175, 1
        %s1559 = smul.addr %s1558, 16
        %s1560 = scalar_lea.vmem [#allocation10], %s1559
        // Predicated region
        $region57: #{_mlpa_loss.1} parent=35 // pred_check
          %p1561 = pneg %p157
        $region58: #{_mlpa_loss.1} parent=35 // pred_check_branch
          %1563 = sbr.rel (%p1561) target = $region60
        $region59: #{_mlpa_loss.1} parent=35 // pred_region
          %s1564 = scalar_lea.vmem %s4, %s28
          // Predicated region
          $region61: #{_mlpa_loss.1} parent=59 // pred_check
            _
          $region62: #{_mlpa_loss.1} parent=59 // pred_check_branch
            %1566 = sbr.rel (0) target = $region64
          $region63: #{_mlpa_loss.1} parent=59 // pred_region
            // Predicated region
            $region65: #{_mlpa_loss.1} parent=63 // pred_check
              _
            $region66: #{_mlpa_loss.1} parent=63 // pred_check_branch
              %1568 = sbr.rel target = $region68
            $region67: #{_mlpa_loss.1} parent=63 // pred_region
              // Predicated region
              $region80: #{_mlpa_loss.1} parent=67 // pred_check
                _
              $region81: #{_mlpa_loss.1} parent=67 // pred_check_branch
                %1586 = sbr.rel (0) target = $region83
              $region82: #{_mlpa_loss.1} parent=67 // pred_region
                %s1588 = ssub.s32 2, 1
                loop: start=0, step=1, limit=1
                $region84: #{_mlpa_loss.1} parent=82 // loop_pre_header
                  _
                $region85: #{_mlpa_loss.1} parent=82 // loop_header
                  %s1590 = sphi 0, %s1594
                  %p1591 = scmp.ge.s32.totalorder %s1590, 1
                  %s1595 = sphi %s1556, %s1556
                  %s1596 = sphi %s1564, %s1564
                $region86: #{_mlpa_loss.1} parent=82 // loop_header_branch
                  %1593 = sbr.rel (%p1591) target = $region90
                $region87: #{_mlpa_loss.1} parent=82 // loop_body
                  %v1597 = vld [vmem:[%s1595] sm:%s1588]
                  %1598 = vst [vmem:[%s1596] sm:%s1588] %v1597
                  %v1599 = vld [vmem:[%s1595 + $0x1] sm:%s1588]
                  %1600 = vst [vmem:[%s1596 + $0x2] sm:%s1588] %v1599
                $region88: #{_mlpa_loss.1} parent=82 // loop_footer
                  %s1594 = sadd.s32 1, %s1590
                $region89: #{_mlpa_loss.1} parent=82 // loop_footer_branch
                  %1589 = sbr.rel target = $region85
                $region90: #{_mlpa_loss.1} parent=82 // loop_exit
                  _
              $region83: #{_mlpa_loss.1} parent=67 // pred_fallthru
                _
            $region68: #{_mlpa_loss.1} parent=63 // pred_fallthru
              _
            // Predicated region
            $region69: #{_mlpa_loss.1} parent=63 // pred_check
              _
            $region70: #{_mlpa_loss.1} parent=63 // pred_check_branch
              %1570 = sbr.rel (0) target = $region72
            $region71: #{_mlpa_loss.1} parent=63 // pred_region
              %s1572 = ssub.s32 2, 1
              loop: start=0, step=1, limit=1
              $region73: #{_mlpa_loss.1} parent=71 // loop_pre_header
                _
              $region74: #{_mlpa_loss.1} parent=71 // loop_header
                %s1574 = sphi 0, %s1578
                %p1575 = scmp.ge.s32.totalorder %s1574, 1
                %s1579 = sphi %s1556, %s1556
                %s1580 = sphi %s1564, %s1564
              $region75: #{_mlpa_loss.1} parent=71 // loop_header_branch
                %1577 = sbr.rel (%p1575) target = $region79
              $region76: #{_mlpa_loss.1} parent=71 // loop_body
                %v1581 = vld [vmem:[%s1579] sm:%s1572]
                %1582 = vst [vmem:[%s1580] sm:%s1572] %v1581
                %v1583 = vld [vmem:[%s1579 + $0x1] sm:%s1572]
                %1584 = vst [vmem:[%s1580 + $0x2] sm:%s1572] %v1583
              $region77: #{_mlpa_loss.1} parent=71 // loop_footer
                %s1578 = sadd.s32 1, %s1574
              $region78: #{_mlpa_loss.1} parent=71 // loop_footer_branch
                %1573 = sbr.rel target = $region74
              $region79: #{_mlpa_loss.1} parent=71 // loop_exit
                _
            $region72: #{_mlpa_loss.1} parent=63 // pred_fallthru
              _
          $region64: #{_mlpa_loss.1} parent=59 // pred_fallthru
            _
          %1601 = vnop
        $region60: #{_mlpa_loss.1} parent=35 // pred_fallthru
          _
        // Predicated region
        $region91: #{_mlpa_loss.1} parent=35 // pred_check
          %p1602 = pneg %p185
        $region92: #{_mlpa_loss.1} parent=35 // pred_check_branch
          %1604 = sbr.rel (%p1602) target = $region94
        $region93: #{_mlpa_loss.1} parent=35 // pred_region
          %s1605 = smul.u32 2, %s29
          %s1606 = smul.addr %s28, 2
          %s1607 = sadd.s32 %s1605, %s1606
          %s1608 = smul.addr %s1607, 4
          %s1609 = scalar_lea.vmem %s5, %s1608
          // Predicated region
          $region95: #{_mlpa_loss.1} parent=93 // pred_check
            _
          $region96: #{_mlpa_loss.1} parent=93 // pred_check_branch
            %1611 = sbr.rel (0) target = $region98
          $region97: #{_mlpa_loss.1} parent=93 // pred_region
            // Predicated region
            $region99: #{_mlpa_loss.1} parent=97 // pred_check
              _
            $region100: #{_mlpa_loss.1} parent=97 // pred_check_branch
              %1613 = sbr.rel target = $region102
            $region101: #{_mlpa_loss.1} parent=97 // pred_region
              // Predicated region
              $region114: #{_mlpa_loss.1} parent=101 // pred_check
                _
              $region115: #{_mlpa_loss.1} parent=101 // pred_check_branch
                %1635 = sbr.rel (0) target = $region117
              $region116: #{_mlpa_loss.1} parent=101 // pred_region
                loop: start=0, step=1, limit=1
                $region118: #{_mlpa_loss.1} parent=116 // loop_pre_header
                  _
                $region119: #{_mlpa_loss.1} parent=116 // loop_header
                  %s1637 = sphi 0, %s1641
                  %p1638 = scmp.ge.s32.totalorder %s1637, 1
                  %s1642 = sphi %s1560, %s1560
                  %s1643 = sphi %s1609, %s1609
                $region120: #{_mlpa_loss.1} parent=116 // loop_header_branch
                  %1640 = sbr.rel (%p1638) target = $region124
                $region121: #{_mlpa_loss.1} parent=116 // loop_body
                  _
                $region122: #{_mlpa_loss.1} parent=116 // loop_footer
                  %s1641 = sadd.s32 1, %s1637
                $region123: #{_mlpa_loss.1} parent=116 // loop_footer_branch
                  %1636 = sbr.rel target = $region119
                $region124: #{_mlpa_loss.1} parent=116 // loop_exit
                  _
                %s1645 = ssub.s32 16, 1
                loop: start=0, step=1, limit=1
                $region125: #{_mlpa_loss.1} parent=116 // loop_pre_header
                  _
                $region126: #{_mlpa_loss.1} parent=116 // loop_header
                  %s1647 = sphi 0, %s1651
                  %p1648 = scmp.ge.s32.totalorder %s1647, 1
                  %s1652 = sphi %s1560, %s1560
                  %s1653 = sphi %s1609, %s1609
                $region127: #{_mlpa_loss.1} parent=116 // loop_header_branch
                  %1650 = sbr.rel (%p1648) target = $region131
                $region128: #{_mlpa_loss.1} parent=116 // loop_body
                  %v1654 = vld [vmem:[%s1652] sm:%s1645]
                  %1655 = vst [vmem:[%s1653] sm:%s1645] %v1654
                  %v1656 = vld [vmem:[%s1652 + $0x4] sm:%s1645]
                  %1657 = vst [vmem:[%s1653 + $0x4] sm:%s1645] %v1656
                  %v1658 = vld [vmem:[%s1652 + $0x8] sm:%s1645]
                  %1659 = vst [vmem:[%s1653 + $0x10] sm:%s1645] %v1658
                  %v1660 = vld [vmem:[%s1652 + $0xc] sm:%s1645]
                  %1661 = vst [vmem:[%s1653 + $0x14] sm:%s1645] %v1660
                $region129: #{_mlpa_loss.1} parent=116 // loop_footer
                  %s1651 = sadd.s32 1, %s1647
                $region130: #{_mlpa_loss.1} parent=116 // loop_footer_branch
                  %1646 = sbr.rel target = $region126
                $region131: #{_mlpa_loss.1} parent=116 // loop_exit
                  _
              $region117: #{_mlpa_loss.1} parent=101 // pred_fallthru
                _
            $region102: #{_mlpa_loss.1} parent=97 // pred_fallthru
              _
            // Predicated region
            $region103: #{_mlpa_loss.1} parent=97 // pred_check
              _
            $region104: #{_mlpa_loss.1} parent=97 // pred_check_branch
              %1615 = sbr.rel (0) target = $region106
            $region105: #{_mlpa_loss.1} parent=97 // pred_region
              %s1617 = ssub.s32 16, 1
              loop: start=0, step=1, limit=1
              $region107: #{_mlpa_loss.1} parent=105 // loop_pre_header
                _
              $region108: #{_mlpa_loss.1} parent=105 // loop_header
                %s1619 = sphi 0, %s1623
                %p1620 = scmp.ge.s32.totalorder %s1619, 1
                %s1624 = sphi %s1560, %s1560
                %s1625 = sphi %s1609, %s1609
              $region109: #{_mlpa_loss.1} parent=105 // loop_header_branch
                %1622 = sbr.rel (%p1620) target = $region113
              $region110: #{_mlpa_loss.1} parent=105 // loop_body
                %v1626 = vld [vmem:[%s1624] sm:%s1617]
                %1627 = vst [vmem:[%s1625] sm:%s1617] %v1626
                %v1628 = vld [vmem:[%s1624 + $0x4] sm:%s1617]
                %1629 = vst [vmem:[%s1625 + $0x4] sm:%s1617] %v1628
                %v1630 = vld [vmem:[%s1624 + $0x8] sm:%s1617]
                %1631 = vst [vmem:[%s1625 + $0x10] sm:%s1617] %v1630
                %v1632 = vld [vmem:[%s1624 + $0xc] sm:%s1617]
                %1633 = vst [vmem:[%s1625 + $0x14] sm:%s1617] %v1632
              $region111: #{_mlpa_loss.1} parent=105 // loop_footer
                %s1623 = sadd.s32 1, %s1619
              $region112: #{_mlpa_loss.1} parent=105 // loop_footer_branch
                %1618 = sbr.rel target = $region108
              $region113: #{_mlpa_loss.1} parent=105 // loop_exit
                _
            $region106: #{_mlpa_loss.1} parent=97 // pred_fallthru
              _
          $region98: #{_mlpa_loss.1} parent=93 // pred_fallthru
            _
          %1662 = vnop
        $region94: #{_mlpa_loss.1} parent=35 // pred_fallthru
          _
      $region36: #{_mlpa_loss.1} parent=5 // pred_fallthru
        _
      %p1663 = scmp.le.s32.totalorder 2, %s19
      // Predicated region
      $region132: #{_mlpa_loss.1} parent=5 // pred_check
        %p1664 = pneg %p1663
      $region133: #{_mlpa_loss.1} parent=5 // pred_check_branch
        %1666 = sbr.rel (%p1664) target = $region135
      $region134: #{_mlpa_loss.1} parent=5 // pred_region
        %s1667 = ssub.s32 %s19, 2
        // Predicated region
        $region136: #{_mlpa_loss.1} parent=134 // pred_check
          %p1668 = pneg %p163
        $region137: #{_mlpa_loss.1} parent=134 // pred_check_branch
          %1670 = sbr.rel (%p1668) target = $region139
        $region138: #{_mlpa_loss.1} parent=134 // pred_region
          %s1671 = sand.u32 %s148, 1
          %s1672 = sand.u32 %s148, 1
          %s1673 = smul.addr %s1672, 2
          %s1674 = scalar_lea.vmem [#allocation9], %s1673
        $region139: #{_mlpa_loss.1} parent=134 // pred_fallthru
          _
        // Predicated region
        $region140: #{_mlpa_loss.1} parent=134 // pred_check
          %p1675 = pneg %p191
        $region141: #{_mlpa_loss.1} parent=134 // pred_check_branch
          %1677 = sbr.rel (%p1675) target = $region143
        $region142: #{_mlpa_loss.1} parent=134 // pred_region
          %s1678 = sand.u32 %s176, 1
          %s1679 = sand.u32 %s176, 1
          %s1680 = smul.addr %s1679, 16
          %s1681 = scalar_lea.vmem [#allocation10], %s1680
        $region143: #{_mlpa_loss.1} parent=134 // pred_fallthru
          _
      $region135: #{_mlpa_loss.1} parent=5 // pred_fallthru
        _
    $region6: #{_mlpa_loss.1} parent=1 // loop_footer
      %s23 = sadd.s32 1, %s19
    $region7: #{_mlpa_loss.1} parent=1 // loop_footer_branch
      %18 = sbr.rel target = $region3
    $region8: #{_mlpa_loss.1} parent=1 // loop_exit
      _
    %1682 = vsyncpa [#allocation3], 1
    %s1683 = scalar_lea.sflag [#allocation3], 1
    %1684 = vsyncpa %s1683, 1
    %1685 = vsyncpa [#allocation5], 1
    %s1686 = scalar_lea.sflag [#allocation5], 1
    %1687 = vsyncpa %s1686, 1
    %1688 = vsyncpa [#allocation8], 1

</llo_original>
